<compile_context>
chip_gen: v7x
topology: tpu7x:2x2x1
jax: 0.10.0
libtpu: 0.0.40
codegen_flags: <defaults>
</compile_context>

<pallas_src>
import jax
import jax.numpy as jnp
from jax import lax
from jax.experimental import pallas as pl
from jax.experimental.pallas import tpu as pltpu


def _round_up(n, m):
    return ((n + m - 1) // m) * m


def metanet_encoder_kernel(x_ref, wcat_ref, w1_ref, b1_ref, w2_ref, b2_ref,
                           sel_ref, out_ref, acc_ref):
    """Grid = (batch tiles, K tiles over the augmented input dim).

    x_ref   : (TB, tk)         bf16  streamed image tile (incl. constant-1 bias col)
    wcat_ref: (tk, (T+1)*Dp)   bf16  streamed [W_enc^T | dW_1^T | ... | dW_T^T]
                                     (biases folded into the row matching the 1-col)
    w1_ref  : (Dp, Hdp) f32,   b1_ref: (1, Hdp) f32   MetaNet layer 1 (zero-padded)
    w2_ref  : (Hdp, Tp) f32,   b2_ref: (1, Tp)  f32   MetaNet layer 2 (zero-padded)
    sel_ref : (Tp, T*Dp) f32   static 0/1 selector: sel[t, t*Dp + d] = 1
    out_ref : (TB, Dp)         encoded features (lane-dense, Dp >= 128)
    acc_ref : (TB, (T+1)*Dp)   f32 VMEM accumulator for the K reduction
    """
    k = pl.program_id(1)

    @pl.when(k == 0)
    def _():
        acc_ref[...] = jnp.zeros_like(acc_ref)

    # One streamed MXU pass per K tile: x against [base | all task deltas] at once.
    acc_ref[...] += jnp.dot(x_ref[...], wcat_ref[...],
                            preferred_element_type=jnp.float32)

    @pl.when(k == pl.num_programs(1) - 1)
    def _():
        Dp = out_ref.shape[1]
        T = sel_ref.shape[1] // Dp
        y = acc_ref[...]
        feat = y[:, :Dp]           # base-encoder features (b_enc already folded in)
        delta = y[:, Dp:]          # x @ dW_t^T + db_t for every task t, lane-dense

        # MetaNet: Linear -> ReLU -> Linear -> per-sample composition coefficients.
        h = jnp.maximum(
            jnp.dot(feat, w1_ref[...], preferred_element_type=jnp.float32)
            + b1_ref[...], 0.0)
        coefs = jnp.dot(h, w2_ref[...],
                        preferred_element_type=jnp.float32) + b2_ref[...]

        # Lane-dense epilogue: replicate coefficient t across its Dp-wide lane
        # group with one MXU selector matmul, one dense VPU multiply, then T
        # lane-aligned (128-wide) adds.  No sub-128-lane masked ops, no per-t
        # broadcast_in_dim.
        coefs_rep = jnp.dot(coefs, sel_ref[...],
                            preferred_element_type=jnp.float32)     # (TB, T*Dp)
        weighted = coefs_rep * delta
        out = feat
        for t in range(T):         # T is small and static -> unrolled
            out = out + weighted[:, t * Dp:(t + 1) * Dp]
        out_ref[...] = out.astype(out_ref.dtype)


def metanet_image_encoder(x, params, *, compute_dtype=jnp.bfloat16,
                          out_dtype=jnp.float32, tk=None,
                          stream_budget_bytes=24 * 2**20):
    """x: (B, C, H, W) NCHW.  Returns (B, D) features (out_dtype, default f32)."""
    w_enc, b_enc, w1, b1, w2, b2, dw, db = params
    B = x.shape[0]
    IN = x.shape[1] * x.shape[2] * x.shape[3]
    D = w_enc.shape[0]
    Hd = w1.shape[0]
    T = w2.shape[0]

    # ---- lane-dense padded dims ---------------------------------------------
    Dp = _round_up(max(D, 128), 128)     # feature / output lanes
    Hdp = _round_up(max(Hd, 128), 128)   # MetaNet hidden lanes
    Tp = _round_up(max(T, 128), 128)     # coefficient lanes
    N_cat = (T + 1) * Dp
    IN_aug = IN + 1                      # +1: constant-1 column folds every bias

    # ---- batch tiling ---------------------------------------------------------
    B16 = _round_up(B, 16)               # bf16 sublane packing is (16, 128)
    TB = min(128, B16)
    if B16 >= 32:                        # >=2 batch grid steps so the "parallel"
        TB = min(TB, _round_up(B16 // 2, 16))   # axis can split across TCs (v7x)
    B_pad = _round_up(B, TB)

    # ---- K (input-dim) tiling, sized from a VMEM budget -----------------------
    if tk is None:
        per_tk = 2 * 2 * (TB + N_cat)              # bf16 double-buffered x + W_cat
        fixed = 4 * TB * N_cat + 2 * 4 * TB * Dp   # f32 accumulator + out buffers
        tk = max(128, ((stream_budget_bytes - fixed) // per_tk) // 128 * 128)
    tk = int(min(tk, _round_up(IN_aug, 128)))
    INp = _round_up(IN_aug, tk)

    # ---- host-side one-time layout --------------------------------------------
    # W_cat = [W_enc^T | dW_1^T | ... | dW_T^T]; biases live in the row that
    # multiplies the constant-1 column of x; zero-padded to (INp, (T+1)*Dp).
    w_all = jnp.zeros((T + 1, Dp, IN_aug), dtype=jnp.float32)
    w_all = w_all.at[0, :D, :IN].set(jnp.asarray(w_enc, jnp.float32))
    w_all = w_all.at[0, :D, IN].set(jnp.asarray(b_enc, jnp.float32).reshape(-1))
    w_all = w_all.at[1:, :D, :IN].set(jnp.asarray(dw, jnp.float32))
    w_all = w_all.at[1:, :D, IN].set(jnp.asarray(db, jnp.float32))
    w_cat = jnp.pad(w_all.reshape(N_cat, IN_aug).T,
                    ((0, INp - IN_aug), (0, 0))).astype(compute_dtype)

    # MetaNet weights: pre-transposed and zero-padded to lane-dense shapes
    # (zero padding keeps the math exact: padded features/hidden units are 0).
    w1_t = jnp.zeros((Dp, Hdp), jnp.float32).at[:D, :Hd].set(
        jnp.asarray(w1, jnp.float32).T)
    b1_p = jnp.zeros((1, Hdp), jnp.float32).at[:, :Hd].set(
        jnp.asarray(b1, jnp.float32))
    w2_t = jnp.zeros((Hdp, Tp), jnp.float32).at[:Hd, :T].set(
        jnp.asarray(w2, jnp.float32).T)
    b2_p = jnp.zeros((1, Tp), jnp.float32).at[:, :T].set(
        jnp.asarray(b2, jnp.float32))

    # Static 0/1 selector replicating coefficient t across lanes [t*Dp, (t+1)*Dp).
    sel = (jnp.arange(Tp)[:, None] == (jnp.arange(T * Dp) // Dp)[None, :]
           ).astype(jnp.float32)

    # Images: flatten, append constant-1 bias column, zero-pad, cast to bf16.
    x_flat = jnp.asarray(x, jnp.float32).reshape(B, IN)
    x_aug = jnp.concatenate([x_flat, jnp.ones((B, 1), jnp.float32)], axis=1)
    x_aug = jnp.pad(x_aug, ((0, B_pad - B), (0, INp - IN_aug))).astype(compute_dtype)

    # ---- VMEM accounting / compiler params ------------------------------------
    streamed = 2 * 2 * (TB * tk + tk * N_cat)            # double-buffered bf16 tiles
    resident = 4 * (Dp * Hdp + Hdp + Hdp * Tp + Tp + Tp * T * Dp
                    + TB * N_cat + 2 * TB * Dp)          # weights + acc + out bufs
    vmem_limit = int(min(max(int((streamed + resident) * 1.3), 16 * 2**20),
                         64 * 2**20))                    # 64 MiB = v7x physical

    out = pl.pallas_call(
        metanet_encoder_kernel,
        out_shape=jax.ShapeDtypeStruct((B_pad, Dp), out_dtype),
        grid_spec=pltpu.PrefetchScalarGridSpec(
            num_scalar_prefetch=0,
            grid=(B_pad // TB, INp // tk),        # K reduction axis last
            in_specs=[
                pl.BlockSpec((TB, tk), lambda b, k: (b, k)),       # x (streamed)
                pl.BlockSpec((tk, N_cat), lambda b, k: (k, 0)),    # W_cat (streamed)
                # small constant-index operands: single-buffered
                pl.BlockSpec((Dp, Hdp), lambda b, k: (0, 0),
                             pipeline_mode=pl.Buffered(1)),        # MetaNet W1^T
                pl.BlockSpec((1, Hdp), lambda b, k: (0, 0),
                             pipeline_mode=pl.Buffered(1)),        # MetaNet b1
                pl.BlockSpec((Hdp, Tp), lambda b, k: (0, 0),
                             pipeline_mode=pl.Buffered(1)),        # MetaNet W2^T
                pl.BlockSpec((1, Tp), lambda b, k: (0, 0),
                             pipeline_mode=pl.Buffered(1)),        # MetaNet b2
                pl.BlockSpec((Tp, T * Dp), lambda b, k: (0, 0),
                             pipeline_mode=pl.Buffered(1)),        # coef selector
            ],
            out_specs=pl.BlockSpec((TB, Dp), lambda b, k: (b, 0)),
            scratch_shapes=[pltpu.VMEM((TB, N_cat), jnp.float32)],
        ),
        compiler_params=pltpu.CompilerParams(
            dimension_semantics=("parallel", "arbitrary"),
            vmem_limit_bytes=vmem_limit),
    )(x_aug, w_cat, w1_t, b1_p, w2_t, b2_p, sel)

    return out[:B, :D]


def reference_forward(x, params, compute_dtype=jnp.bfloat16):
    """Pure-JAX replica of the PyTorch forward (blockwise=False, eval mode).

    Follows the module's per-sample parameter-composition loop exactly; the
    operands the kernel consumes in bf16 (x, W_enc, dW, b_enc, db) are pre-cast
    the same way so the comparison validates the kernel's math, not the
    quantization choice.
    """
    w_enc, b_enc, w1, b1, w2, b2, dw, db = params
    hp = lax.Precision.HIGHEST
    B = x.shape[0]
    cast = lambda a: jnp.asarray(a, jnp.float32).astype(compute_dtype).astype(jnp.float32)
    x_flat = cast(x.reshape(B, -1))
    w_enc_c, b_enc_c, dw_c, db_c = cast(w_enc), cast(b_enc), cast(dw), cast(db)

    feat = jnp.dot(x_flat, w_enc_c.T, precision=hp) + b_enc_c[0]
    h = jnp.maximum(jnp.dot(feat, w1.T, precision=hp) + b1[0], 0.0)
    coefs = jnp.dot(h, w2.T, precision=hp) + b2[0]                     # (B, T)

    outs = []
    for i in range(B):
        new_w = w_enc_c + jnp.einsum('t,tdi->di', coefs[i], dw_c, precision=hp)
        new_b = b_enc_c[0] + jnp.dot(coefs[i], db_c, precision=hp)
        outs.append(jnp.dot(x_flat[i:i + 1], new_w.T, precision=hp) + new_b)
    return jnp.concatenate(outs, axis=0)


if __name__ == "__main__":
    # Small, module-consistent shapes.
    B, C, H, W = 2, 3, 16, 16
    IN = C * H * W          # 768 flattened image features
    D = 32                  # feat_dim of the base encoder
    T = 4                   # number of task vectors
    Hd = max(D // 4, T)     # MetaNet hidden dim (= 8)

    key = jax.random.PRNGKey(0)
    keys = jax.random.split(key, 10)

    x = jax.random.normal(keys[0], (B, C, H, W), dtype=jnp.float32)

    # Frozen base-encoder params.
    w_enc = jax.random.normal(keys[1], (D, IN), dtype=jnp.float32) * 0.02
    b_enc = jax.random.normal(keys[2], (1, D), dtype=jnp.float32) * 0.02
    # MetaNet params (layer-0 init: normal(0, 0.01) as in the module).
    w1 = jax.random.normal(keys[3], (Hd, D), dtype=jnp.float32) * 0.01
    b1 = jax.random.normal(keys[4], (1, Hd), dtype=jnp.float32) * 0.01
    w2 = jax.random.normal(keys[5], (T, Hd), dtype=jnp.float32) * 0.1
    b2 = jax.random.normal(keys[6], (1, T), dtype=jnp.float32) * 0.1
    # Task vectors: one (dW, db) delta per task, stacked.
    dw = jax.random.normal(keys[7], (T, D, IN), dtype=jnp.float32) * 0.01
    db = jax.random.normal(keys[8], (T, D), dtype=jnp.float32) * 0.01

    params = (w_enc, b_enc, w1, b1, w2, b2, dw, db)

    # tk=256 forces the multi-step K-reduction path (IN+1=769 -> 4 K tiles).
    out = metanet_image_encoder(x, params, tk=256)
    out = jax.block_until_ready(out)

    ref = reference_forward(x, params)
    assert out.shape == (B, D), out.shape
    assert jnp.allclose(out, ref, rtol=1e-3, atol=1e-3), \
        float(jnp.max(jnp.abs(out - ref)))

    print("KERNEL_OK")
</pallas_src>

<mosaic_0001>
module attributes {stable_mosaic.version = 11 : i64} {
  func.func @metanet_encoder_kernel(%arg0: i32, %arg1: i32, %arg2: memref<16x256xbf16, #tpu.memory_space<vmem>>, %arg3: memref<256x640xbf16, #tpu.memory_space<vmem>>, %arg4: memref<128x128xf32, #tpu.memory_space<vmem>>, %arg5: memref<1x128xf32, #tpu.memory_space<vmem>>, %arg6: memref<128x128xf32, #tpu.memory_space<vmem>>, %arg7: memref<1x128xf32, #tpu.memory_space<vmem>>, %arg8: memref<128x512xf32, #tpu.memory_space<vmem>>, %arg9: memref<16x128xf32, #tpu.memory_space<vmem>>, %arg10: memref<16x640xf32, #tpu.memory_space<vmem>>) attributes {dimension_semantics = [#tpu.dimension_semantics<parallel>, #tpu.dimension_semantics<arbitrary>], iteration_bounds = array<i64: 1, 4>, scalar_prefetch = 0 : i64, scratch_operands = 1 : i64, tpu.core_type = #tpu.core_type<tc>, window_params = [{transform_indices = @transform_0, window_bounds = array<i64: 16, 256>}, {transform_indices = @transform_1, window_bounds = array<i64: 256, 640>}, {pipeline_mode = #tpu.pipeline_mode<synchronous>, transform_indices = @transform_2, window_bounds = array<i64: 128, 128>}, {pipeline_mode = #tpu.pipeline_mode<synchronous>, transform_indices = @transform_3, window_bounds = array<i64: 1, 128>}, {pipeline_mode = #tpu.pipeline_mode<synchronous>, transform_indices = @transform_4, window_bounds = array<i64: 128, 128>}, {pipeline_mode = #tpu.pipeline_mode<synchronous>, transform_indices = @transform_5, window_bounds = array<i64: 1, 128>}, {pipeline_mode = #tpu.pipeline_mode<synchronous>, transform_indices = @transform_6, window_bounds = array<i64: 128, 512>}, {transform_indices = @transform_7, window_bounds = array<i64: 16, 128>}]} {
    %c0_i32 = arith.constant 0 : i32
    %0 = arith.cmpi eq, %arg1, %c0_i32 : i32
    %1 = arith.extui %0 : i1 to i32
    %c0_i32_0 = arith.constant 0 : i32
    %2 = arith.cmpi ne, %1, %c0_i32_0 : i32
    scf.if %2 {
      %cst_9 = arith.constant 0.000000e+00 : f32
      %12 = vector.broadcast %cst_9 : f32 to vector<16x640xf32>
      %c0_10 = arith.constant 0 : index
      %c0_11 = arith.constant 0 : index
      %13 = vector.load %arg10[%c0_10, %c0_11] : memref<16x640xf32, #tpu.memory_space<vmem>>, vector<16x640xf32>
      tpu.vector_store %arg10[%c0_10, %c0_11], %12 {strides = array<i32>} : memref<16x640xf32, #tpu.memory_space<vmem>>, vector<16x640xf32>,
    } else {
    }
    %c0 = arith.constant 0 : index
    %c0_1 = arith.constant 0 : index
    %3 = vector.load %arg10[%c0, %c0_1] : memref<16x640xf32, #tpu.memory_space<vmem>>, vector<16x640xf32>
    %c0_2 = arith.constant 0 : index
    %c0_3 = arith.constant 0 : index
    %4 = vector.load %arg2[%c0_2, %c0_3] : memref<16x256xbf16, #tpu.memory_space<vmem>>, vector<16x256xbf16>
    %c0_4 = arith.constant 0 : index
    %c0_5 = arith.constant 0 : index
    %5 = vector.load %arg3[%c0_4, %c0_5] : memref<256x640xbf16, #tpu.memory_space<vmem>>, vector<256x640xbf16>
    %cst = arith.constant dense<0.000000e+00> : vector<16x640xf32>
    %6 = tpu.matmul %4, %5, %cst {dimension_numbers = #tpu.dot_dimension_numbers<[1], [0], [0], [1], [0, 0, 1, 1], [], []>} : vector<16x256xbf16>, vector<256x640xbf16>, vector<16x640xf32> -> vector<16x640xf32>
    %7 = arith.addf %3, %6 : vector<16x640xf32>
    %c0_6 = arith.constant 0 : index
    %c0_7 = arith.constant 0 : index
    %8 = vector.load %arg10[%c0_6, %c0_7] : memref<16x640xf32, #tpu.memory_space<vmem>>, vector<16x640xf32>
    tpu.vector_store %arg10[%c0_6, %c0_7], %7 {strides = array<i32>} : memref<16x640xf32, #tpu.memory_space<vmem>>, vector<16x640xf32>,
    %c3_i32 = arith.constant 3 : i32
    %9 = arith.cmpi eq, %arg1, %c3_i32 : i32
    %10 = arith.extui %9 : i1 to i32
    %c0_i32_8 = arith.constant 0 : i32
    %11 = arith.cmpi ne, %10, %c0_i32_8 : i32
    scf.if %11 {
      %c0_9 = arith.constant 0 : index
      %c0_10 = arith.constant 0 : index
      %12 = vector.load %arg10[%c0_9, %c0_10] : memref<16x640xf32, #tpu.memory_space<vmem>>, vector<16x640xf32>
      %13 = vector.extract_strided_slice %12 {offsets = [0, 0], sizes = [16, 128], strides = [1, 1]} : vector<16x640xf32> to vector<16x128xf32>
      %14 = vector.extract_strided_slice %12 {offsets = [0, 128], sizes = [16, 512], strides = [1, 1]} : vector<16x640xf32> to vector<16x512xf32>
      %c0_11 = arith.constant 0 : index
      %c0_12 = arith.constant 0 : index
      %15 = vector.load %arg4[%c0_11, %c0_12] : memref<128x128xf32, #tpu.memory_space<vmem>>, vector<128x128xf32>
      %cst_13 = arith.constant dense<0.000000e+00> : vector<16x128xf32>
      %16 = tpu.matmul %13, %15, %cst_13 {dimension_numbers = #tpu.dot_dimension_numbers<[1], [0], [0], [1], [0, 0, 1, 1], [], []>} : vector<16x128xf32>, vector<128x128xf32>, vector<16x128xf32> -> vector<16x128xf32>
      %c0_14 = arith.constant 0 : index
      %c0_15 = arith.constant 0 : index
      %17 = vector.load %arg5[%c0_14, %c0_15] : memref<1x128xf32, #tpu.memory_space<vmem>>, vector<1x128xf32>
      %18 = vector.broadcast %17 : vector<1x128xf32> to vector<16x128xf32>
      %19 = arith.addf %16, %18 : vector<16x128xf32>
      %cst_16 = arith.constant 0.000000e+00 : f32
      %20 = vector.broadcast %cst_16 : f32 to vector<16x128xf32>
      %21 = arith.maximumf %19, %20 : vector<16x128xf32>
      %c0_17 = arith.constant 0 : index
      %c0_18 = arith.constant 0 : index
      %22 = vector.load %arg6[%c0_17, %c0_18] : memref<128x128xf32, #tpu.memory_space<vmem>>, vector<128x128xf32>
      %cst_19 = arith.constant dense<0.000000e+00> : vector<16x128xf32>
      %23 = tpu.matmul %21, %22, %cst_19 {dimension_numbers = #tpu.dot_dimension_numbers<[1], [0], [0], [1], [0, 0, 1, 1], [], []>} : vector<16x128xf32>, vector<128x128xf32>, vector<16x128xf32> -> vector<16x128xf32>
      %c0_20 = arith.constant 0 : index
      %c0_21 = arith.constant 0 : index
      %24 = vector.load %arg7[%c0_20, %c0_21] : memref<1x128xf32, #tpu.memory_space<vmem>>, vector<1x128xf32>
      %25 = vector.broadcast %24 : vector<1x128xf32> to vector<16x128xf32>
      %26 = arith.addf %23, %25 : vector<16x128xf32>
      %c0_22 = arith.constant 0 : index
      %c0_23 = arith.constant 0 : index
      %27 = vector.load %arg8[%c0_22, %c0_23] : memref<128x512xf32, #tpu.memory_space<vmem>>, vector<128x512xf32>
      %cst_24 = arith.constant dense<0.000000e+00> : vector<16x512xf32>
      %28 = tpu.matmul %26, %27, %cst_24 {dimension_numbers = #tpu.dot_dimension_numbers<[1], [0], [0], [1], [0, 0, 1, 1], [], []>} : vector<16x128xf32>, vector<128x512xf32>, vector<16x512xf32> -> vector<16x512xf32>
      %29 = arith.mulf %28, %14 : vector<16x512xf32>
      %30 = vector.extract_strided_slice %29 {offsets = [0, 0], sizes = [16, 128], strides = [1, 1]} : vector<16x512xf32> to vector<16x128xf32>
      %31 = arith.addf %13, %30 : vector<16x128xf32>
      %32 = vector.extract_strided_slice %29 {offsets = [0, 128], sizes = [16, 128], strides = [1, 1]} : vector<16x512xf32> to vector<16x128xf32>
      %33 = arith.addf %31, %32 : vector<16x128xf32>
      %34 = vector.extract_strided_slice %29 {offsets = [0, 256], sizes = [16, 128], strides = [1, 1]} : vector<16x512xf32> to vector<16x128xf32>
      %35 = arith.addf %33, %34 : vector<16x128xf32>
      %36 = vector.extract_strided_slice %29 {offsets = [0, 384], sizes = [16, 128], strides = [1, 1]} : vector<16x512xf32> to vector<16x128xf32>
      %37 = arith.addf %35, %36 : vector<16x128xf32>
      %c0_25 = arith.constant 0 : index
      %c0_26 = arith.constant 0 : index
      %38 = vector.load %arg9[%c0_25, %c0_26] : memref<16x128xf32, #tpu.memory_space<vmem>>, vector<16x128xf32>
      tpu.vector_store %arg9[%c0_25, %c0_26], %37 {strides = array<i32>} : memref<16x128xf32, #tpu.memory_space<vmem>>, vector<16x128xf32>,
    } else {
    }
    return
  }
  func.func @transform_0(%arg0: i32, %arg1: i32) -> (i32, i32) {
    %c0_i32 = arith.constant 0 : i32
    return %arg0, %arg1 : i32, i32
  }
  func.func @transform_1(%arg0: i32, %arg1: i32) -> (i32, i32) {
    %c0_i32 = arith.constant 0 : i32
    %c0_i32_0 = arith.constant 0 : i32
    return %arg1, %c0_i32 : i32, i32
  }
  func.func @transform_2(%arg0: i32, %arg1: i32) -> (i32, i32) {
    %c0_i32 = arith.constant 0 : i32
    %c0_i32_0 = arith.constant 0 : i32
    %c0_i32_1 = arith.constant 0 : i32
    return %c0_i32, %c0_i32_0 : i32, i32
  }
  func.func @transform_3(%arg0: i32, %arg1: i32) -> (i32, i32) {
    %c0_i32 = arith.constant 0 : i32
    %c0_i32_0 = arith.constant 0 : i32
    %c0_i32_1 = arith.constant 0 : i32
    return %c0_i32, %c0_i32_0 : i32, i32
  }
  func.func @transform_4(%arg0: i32, %arg1: i32) -> (i32, i32) {
    %c0_i32 = arith.constant 0 : i32
    %c0_i32_0 = arith.constant 0 : i32
    %c0_i32_1 = arith.constant 0 : i32
    return %c0_i32, %c0_i32_0 : i32, i32
  }
  func.func @transform_5(%arg0: i32, %arg1: i32) -> (i32, i32) {
    %c0_i32 = arith.constant 0 : i32
    %c0_i32_0 = arith.constant 0 : i32
    %c0_i32_1 = arith.constant 0 : i32
    return %c0_i32, %c0_i32_0 : i32, i32
  }
  func.func @transform_6(%arg0: i32, %arg1: i32) -> (i32, i32) {
    %c0_i32 = arith.constant 0 : i32
    %c0_i32_0 = arith.constant 0 : i32
    %c0_i32_1 = arith.constant 0 : i32
    return %c0_i32, %c0_i32_0 : i32, i32
  }
  func.func @transform_7(%arg0: i32, %arg1: i32) -> (i32, i32) {
    %c0_i32 = arith.constant 0 : i32
    %c0_i32_0 = arith.constant 0 : i32
    return %arg0, %c0_i32 : i32, i32
  }
}

</mosaic_0001>

<llo_original>
// kernel: tpu_custom_call.1
$region0: #{tpu_custom_call.1}
  #allocation0 [shape = 'u32[]', space=smem, size = 0x4, offset = 0x4, fixed_abs, tag = 'smem constant byte address 0x4 - core index']
  #allocation1 [shape = 'u32[144,128]{1,0:T(1,128)}', space=vmem, size = 0x12000, scoped, tag = 'internal scratch']
  #allocation2 [shape = 'f32[16,640]{1,0:T(8,128)}', space=vmem, size = 0xa000, scoped, tag = 'scratch operand']
  %s0 = inlined_call_operand.hbm [shape: bf16[16,1024], index: 0, kind: input, shape index: {}]
  %s1 = inlined_call_operand.hbm [shape: bf16[1024,640], index: 1, kind: input, shape index: {}]
  %s2 = inlined_call_operand.hbm [shape: f32[128,128], index: 2, kind: input, shape index: {}]
  %s3 = inlined_call_operand.hbm [shape: f32[1,128], index: 3, kind: input, shape index: {}]
  %s4 = inlined_call_operand.hbm [shape: f32[128,128], index: 4, kind: input, shape index: {}]
  %s5 = inlined_call_operand.hbm [shape: f32[1,128], index: 5, kind: input, shape index: {}]
  %s6 = inlined_call_operand.hbm [shape: f32[128,512], index: 6, kind: input, shape index: {}]
  %s7 = inlined_call_operand.hbm [shape: f32[16,128], index: 7, kind: output, shape index: {}]
  %s8 = sld [smem:[#allocation0]]
  $region97: #{tpu_custom_call.1} parent=0
    _
  %s10 = ssub.s32 1, %s8
  %s11 = scalar_select 0, %s10, %s8
  $region1: #{tpu_custom_call.1} parent=0
    #allocation3 [shape = 'u8[16384]{0}', space=vmem, size = 0x4000, scoped, tag = 'input window, operand 0']
    #allocation4 [shape = 's32[2]{0}', space=sflag, size = 0x8, scoped, tag = 'scoped memory for tpu_custom_call.1']
    #allocation5 [shape = 's32[2]{0}', space=sflag, size = 0x8, scoped, tag = 'scoped memory for tpu_custom_call.1']
    #allocation6 [shape = 'u8[655360]{0}', space=vmem, size = 0xa0000, scoped, tag = 'input window, operand 1']
    #allocation7 [shape = 's32[2]{0}', space=sflag, size = 0x8, scoped, tag = 'scoped memory for tpu_custom_call.1']
    #allocation8 [shape = 'u8[65536]{0}', space=vmem, size = 0x10000, scoped, tag = 'input window, operand 2, single buffered']
    #allocation9 [shape = 'u8[512]{0}', space=vmem, size = 0x400, scoped, tag = 'input window, operand 3, single buffered']
    #allocation10 [shape = 's32[1]{0}', space=sflag, size = 0x4, scoped, tag = 'scoped memory for tpu_custom_call.1']
    #allocation11 [shape = 'u8[65536]{0}', space=vmem, size = 0x10000, scoped, tag = 'input window, operand 4, single buffered']
    #allocation12 [shape = 'u8[512]{0}', space=vmem, size = 0x400, scoped, tag = 'input window, operand 5, single buffered']
    #allocation13 [shape = 's32[1]{0}', space=sflag, size = 0x4, scoped, tag = 'scoped memory for tpu_custom_call.1']
    #allocation14 [shape = 'u8[262144]{0}', space=vmem, size = 0x40000, scoped, tag = 'input window, operand 6, single buffered']
    #allocation15 [shape = 'u8[8192]{0}', space=vmem, size = 0x2000, scoped, tag = 'output window, operand 0, single buffered']
    %12 = vsyncpa [#allocation4], 0
    %s13 = scalar_lea.sflag [#allocation4], 1
    %14 = vsyncpa %s13, 0
    %15 = vsyncpa [#allocation7], 0
    %s16 = scalar_lea.sflag [#allocation7], 1
    %17 = vsyncpa %s16, 0
    %18 = vsyncpa [#allocation10], 0
    %19 = vsyncpa [#allocation13], 0
    %20 = vsyncpa [#allocation5], 0
    loop: start=0, step=1, limit=6
    $region2: #{tpu_custom_call.1} parent=1 // loop_pre_header
      _
    $region3: #{tpu_custom_call.1} parent=1 // loop_header
      %s22 = sphi 0, %s26
      %p23 = scmp.ge.s32.totalorder %s22, 6
      %s29 = sphi 0, %s41
      %s30 = sphi 0, %s37
      %s31 = sphi 0, %s29
      %s32 = sphi 0, %s30
      %s33 = sphi 0, %s31
      %s34 = sphi 0, %s32
      %s46 = sphi 0, %s48
      %s49 = sphi 0, %s46
      %s50 = sphi 0, %s49
      %s66 = sphi 0, %s50
      %s72 = sphi 0, %s74
      %s75 = sphi 0, %s72
      %s76 = sphi 0, %s75
      %s92 = sphi 0, %s76
      %s96 = sphi 0, %s96
      %s98 = sphi 0, %s96
      %s99 = sphi 0, %s98
      %s113 = sphi 0, %s99
      %s117 = sphi 0, %s117
      %s119 = sphi 0, %s117
      %s120 = sphi 0, %s119
      %s134 = sphi 0, %s120
      %s138 = sphi 0, %s138
      %s140 = sphi 0, %s138
      %s141 = sphi 0, %s140
      %s155 = sphi 0, %s141
      %s159 = sphi 0, %s159
      %s161 = sphi 0, %s159
      %s162 = sphi 0, %s161
      %s176 = sphi 0, %s162
      %s180 = sphi 0, %s180
      %s182 = sphi 0, %s180
      %s183 = sphi 0, %s182
      %s197 = sphi 0, %s183
      %s203 = sphi 0, %s205
      %s206 = sphi 0, %s203
      %s207 = sphi 0, %s206
      %s223 = sphi 0, %s207
    $region4: #{tpu_custom_call.1} parent=1 // loop_header_branch
      %25 = sbr.rel (%p23) target = $region8
    $region5: #{tpu_custom_call.1} parent=1 // loop_body
      %s27 = ssub.s32 %s22, 1
      %s28 = ssub.s32 %s22, 2
      %s35 = sadd.s32 1, %s30
      %p36 = scmp.ge.s32.totalorder %s35, 4
      %s37 = scalar_select %p36, 0, %s35
      %s38 = sadd.s32 1, %s29
      %s39 = scalar_select %p36, %s38, %s29
      %p40 = scmp.ge.s32.totalorder %s39, 1
      %s41 = scalar_select %p40, 0, %s39
      %s42 = ssub.s32 %s29, %s41
      %s43 = ssub.s32 %s30, %s37
      %s44 = sor.u32 %s42, %s43
      %p45 = scmp.eq.s32.totalorder %s44, 0
      %s47 = sadd.s32 %s46, 1
      %s48 = scalar_select %p45, %s46, %s47
      %p51 = pneg %p45
      %p52 = scmp.eq.s32.totalorder %s22, 3
      %p53 = por %p51, %p52
      %p54 = scmp.ne.s32.totalorder %s46, %s49
      %p55 = scmp.eq.s32.totalorder %s22, 0
      %p56 = por %p54, %p55
      %p57 = scmp.ne.s32.totalorder %s46, %s49
      %p58 = scmp.eq.s32.totalorder %s27, 3
      %p59 = por %p57, %p58
      %p60 = scmp.ne.s32.totalorder %s49, %s50
      %p61 = scmp.eq.s32.totalorder %s27, 0
      %p62 = por %p60, %p61
      %p63 = scmp.ne.s32.totalorder %s49, %s50
      %p64 = scmp.eq.s32.totalorder %s28, 3
      %p65 = por %p63, %p64
      %p67 = scmp.ne.s32.totalorder %s50, %s66
      %p68 = scmp.eq.s32.totalorder %s28, 0
      %p69 = por %p67, %p68
      %s70 = ssub.s32 %s30, %s37
      %p71 = scmp.eq.s32.totalorder %s70, 0
      %s73 = sadd.s32 %s72, 1
      %s74 = scalar_select %p71, %s72, %s73
      %p77 = pneg %p71
      %p78 = scmp.eq.s32.totalorder %s22, 3
      %p79 = por %p77, %p78
      %p80 = scmp.ne.s32.totalorder %s72, %s75
      %p81 = scmp.eq.s32.totalorder %s22, 0
      %p82 = por %p80, %p81
      %p83 = scmp.ne.s32.totalorder %s72, %s75
      %p84 = scmp.eq.s32.totalorder %s27, 3
      %p85 = por %p83, %p84
      %p86 = scmp.ne.s32.totalorder %s75, %s76
      %p87 = scmp.eq.s32.totalorder %s27, 0
      %p88 = por %p86, %p87
      %p89 = scmp.ne.s32.totalorder %s75, %s76
      %p90 = scmp.eq.s32.totalorder %s28, 3
      %p91 = por %p89, %p90
      %p93 = scmp.ne.s32.totalorder %s76, %s92
      %p94 = scmp.eq.s32.totalorder %s28, 0
      %p95 = por %p93, %p94
      %s97 = sadd.s32 %s96, 1
      %p100 = scmp.eq.s32.totalorder %s22, 3
      %p101 = scmp.ne.s32.totalorder %s96, %s98
      %p102 = scmp.eq.s32.totalorder %s22, 0
      %p103 = por %p101, %p102
      %p104 = scmp.ne.s32.totalorder %s96, %s98
      %p105 = scmp.eq.s32.totalorder %s27, 3
      %p106 = por %p104, %p105
      %p107 = scmp.ne.s32.totalorder %s98, %s99
      %p108 = scmp.eq.s32.totalorder %s27, 0
      %p109 = por %p107, %p108
      %p110 = scmp.ne.s32.totalorder %s98, %s99
      %p111 = scmp.eq.s32.totalorder %s28, 3
      %p112 = por %p110, %p111
      %p114 = scmp.ne.s32.totalorder %s99, %s113
      %p115 = scmp.eq.s32.totalorder %s28, 0
      %p116 = por %p114, %p115
      %s118 = sadd.s32 %s117, 1
      %p121 = scmp.eq.s32.totalorder %s22, 3
      %p122 = scmp.ne.s32.totalorder %s117, %s119
      %p123 = scmp.eq.s32.totalorder %s22, 0
      %p124 = por %p122, %p123
      %p125 = scmp.ne.s32.totalorder %s117, %s119
      %p126 = scmp.eq.s32.totalorder %s27, 3
      %p127 = por %p125, %p126
      %p128 = scmp.ne.s32.totalorder %s119, %s120
      %p129 = scmp.eq.s32.totalorder %s27, 0
      %p130 = por %p128, %p129
      %p131 = scmp.ne.s32.totalorder %s119, %s120
      %p132 = scmp.eq.s32.totalorder %s28, 3
      %p133 = por %p131, %p132
      %p135 = scmp.ne.s32.totalorder %s120, %s134
      %p136 = scmp.eq.s32.totalorder %s28, 0
      %p137 = por %p135, %p136
      %s139 = sadd.s32 %s138, 1
      %p142 = scmp.eq.s32.totalorder %s22, 3
      %p143 = scmp.ne.s32.totalorder %s138, %s140
      %p144 = scmp.eq.s32.totalorder %s22, 0
      %p145 = por %p143, %p144
      %p146 = scmp.ne.s32.totalorder %s138, %s140
      %p147 = scmp.eq.s32.totalorder %s27, 3
      %p148 = por %p146, %p147
      %p149 = scmp.ne.s32.totalorder %s140, %s141
      %p150 = scmp.eq.s32.totalorder %s27, 0
      %p151 = por %p149, %p150
      %p152 = scmp.ne.s32.totalorder %s140, %s141
      %p153 = scmp.eq.s32.totalorder %s28, 3
      %p154 = por %p152, %p153
      %p156 = scmp.ne.s32.totalorder %s141, %s155
      %p157 = scmp.eq.s32.totalorder %s28, 0
      %p158 = por %p156, %p157
      %s160 = sadd.s32 %s159, 1
      %p163 = scmp.eq.s32.totalorder %s22, 3
      %p164 = scmp.ne.s32.totalorder %s159, %s161
      %p165 = scmp.eq.s32.totalorder %s22, 0
      %p166 = por %p164, %p165
      %p167 = scmp.ne.s32.totalorder %s159, %s161
      %p168 = scmp.eq.s32.totalorder %s27, 3
      %p169 = por %p167, %p168
      %p170 = scmp.ne.s32.totalorder %s161, %s162
      %p171 = scmp.eq.s32.totalorder %s27, 0
      %p172 = por %p170, %p171
      %p173 = scmp.ne.s32.totalorder %s161, %s162
      %p174 = scmp.eq.s32.totalorder %s28, 3
      %p175 = por %p173, %p174
      %p177 = scmp.ne.s32.totalorder %s162, %s176
      %p178 = scmp.eq.s32.totalorder %s28, 0
      %p179 = por %p177, %p178
      %s181 = sadd.s32 %s180, 1
      %p184 = scmp.eq.s32.totalorder %s22, 3
      %p185 = scmp.ne.s32.totalorder %s180, %s182
      %p186 = scmp.eq.s32.totalorder %s22, 0
      %p187 = por %p185, %p186
      %p188 = scmp.ne.s32.totalorder %s180, %s182
      %p189 = scmp.eq.s32.totalorder %s27, 3
      %p190 = por %p188, %p189
      %p191 = scmp.ne.s32.totalorder %s182, %s183
      %p192 = scmp.eq.s32.totalorder %s27, 0
      %p193 = por %p191, %p192
      %p194 = scmp.ne.s32.totalorder %s182, %s183
      %p195 = scmp.eq.s32.totalorder %s28, 3
      %p196 = por %p194, %p195
      %p198 = scmp.ne.s32.totalorder %s183, %s197
      %p199 = scmp.eq.s32.totalorder %s28, 0
      %p200 = por %p198, %p199
      %s201 = ssub.s32 %s29, %s41
      %p202 = scmp.eq.s32.totalorder %s201, 0
      %s204 = sadd.s32 %s203, 1
      %s205 = scalar_select %p202, %s203, %s204
      %p208 = pneg %p202
      %p209 = scmp.eq.s32.totalorder %s22, 3
      %p210 = por %p208, %p209
      %p211 = scmp.ne.s32.totalorder %s203, %s206
      %p212 = scmp.eq.s32.totalorder %s22, 0
      %p213 = por %p211, %p212
      %p214 = scmp.ne.s32.totalorder %s203, %s206
      %p215 = scmp.eq.s32.totalorder %s27, 3
      %p216 = por %p214, %p215
      %p217 = scmp.ne.s32.totalorder %s206, %s207
      %p218 = scmp.eq.s32.totalorder %s27, 0
      %p219 = por %p217, %p218
      %p220 = scmp.ne.s32.totalorder %s206, %s207
      %p221 = scmp.eq.s32.totalorder %s28, 3
      %p222 = por %p220, %p221
      %p224 = scmp.ne.s32.totalorder %s207, %s223
      %p225 = scmp.eq.s32.totalorder %s28, 0
      %p226 = por %p224, %p225
      %p227 = scmp.le.s32.totalorder 1, %s22
      %p228 = scmp.lt.s32.totalorder %s22, 5
      %p229 = pnand %p227, %p228
      %p230 = pneg %p229
      // Predicated region
      $region9: #{tpu_custom_call.1} parent=5 // pred_check
        _
      $region10: #{tpu_custom_call.1} parent=5 // pred_check_branch
        %232 = sbr.rel (%p229) target = $region12
      $region11: #{tpu_custom_call.1} parent=5 // pred_region
        %s233 = ssub.s32 %s22, 1
        // Predicated region
        $region13: #{tpu_custom_call.1} parent=11 // pred_check
          %p234 = pneg %p109
        $region14: #{tpu_custom_call.1} parent=11 // pred_check_branch
          %236 = sbr.rel (%p234) target = $region16
        $region15: #{tpu_custom_call.1} parent=11 // pred_region
          %s238 = ssub.s32 2048, 2048
          %239 = vsyncadd [#allocation7], %s238
          %s240 = sshll.u32 [#allocation8], 4
          %s241 = int_to_ptr.vmem [resolvable:$true] %s240
          %246 = dma.hbm_to_vmem [thread:$0]  %s2, 2048, %s241, [#allocation7], 128, 128, 8
        $region16: #{tpu_custom_call.1} parent=11 // pred_fallthru
          _
        // Predicated region
        $region17: #{tpu_custom_call.1} parent=11 // pred_check
          %p247 = pneg %p130
        $region18: #{tpu_custom_call.1} parent=11 // pred_check_branch
          %249 = sbr.rel (%p247) target = $region20
        $region19: #{tpu_custom_call.1} parent=11 // pred_region
          %s251 = ssub.s32 16, 16
          %252 = vsyncadd [#allocation10], %s251
          %s254 = sshll.u32 [#allocation9], 4
          %s255 = int_to_ptr.vmem [resolvable:$true] %s254
          %257 = dma.hbm_to_vmem [thread:$0]  %s3, 16, %s255, [#allocation10]
        $region20: #{tpu_custom_call.1} parent=11 // pred_fallthru
          _
        // Predicated region
        $region21: #{tpu_custom_call.1} parent=11 // pred_check
          %p258 = pneg %p151
        $region22: #{tpu_custom_call.1} parent=11 // pred_check_branch
          %260 = sbr.rel (%p258) target = $region24
        $region23: #{tpu_custom_call.1} parent=11 // pred_region
          %s262 = ssub.s32 2048, 2048
          %263 = vsyncadd [#allocation10], %s262
          %s264 = sshll.u32 [#allocation11], 4
          %s265 = int_to_ptr.vmem [resolvable:$true] %s264
          %270 = dma.hbm_to_vmem [thread:$0]  %s4, 2048, %s265, [#allocation10], 128, 128, 8
        $region24: #{tpu_custom_call.1} parent=11 // pred_fallthru
          _
        // Predicated region
        $region25: #{tpu_custom_call.1} parent=11 // pred_check
          %p271 = pneg %p172
        $region26: #{tpu_custom_call.1} parent=11 // pred_check_branch
          %273 = sbr.rel (%p271) target = $region28
        $region27: #{tpu_custom_call.1} parent=11 // pred_region
          %s275 = ssub.s32 16, 16
          %276 = vsyncadd [#allocation13], %s275
          %s278 = sshll.u32 [#allocation12], 4
          %s279 = int_to_ptr.vmem [resolvable:$true] %s278
          %281 = dma.hbm_to_vmem [thread:$0]  %s5, 16, %s279, [#allocation13]
        $region28: #{tpu_custom_call.1} parent=11 // pred_fallthru
          _
        // Predicated region
        $region29: #{tpu_custom_call.1} parent=11 // pred_check
          %p282 = pneg %p193
        $region30: #{tpu_custom_call.1} parent=11 // pred_check_branch
          %284 = sbr.rel (%p282) target = $region32
        $region31: #{tpu_custom_call.1} parent=11 // pred_region
          %s286 = ssub.s32 8192, 8192
          %287 = vsyncadd [#allocation13], %s286
          %s288 = sshll.u32 [#allocation14], 4
          %s289 = int_to_ptr.vmem [resolvable:$true] %s288
          %294 = dma.hbm_to_vmem [thread:$0]  %s6, 8192, %s289, [#allocation13], 512, 512, 32
        $region32: #{tpu_custom_call.1} parent=11 // pred_fallthru
          _
      $region12: #{tpu_custom_call.1} parent=5 // pred_fallthru
        _
      %p295 = scmp.lt.s32.totalorder %s22, 4
      // Predicated region
      $region33: #{tpu_custom_call.1} parent=5 // pred_check
        %p296 = pneg %p295
      $region34: #{tpu_custom_call.1} parent=5 // pred_check_branch
        %298 = sbr.rel (%p296) target = $region36
      $region35: #{tpu_custom_call.1} parent=5 // pred_region
        // Predicated region
        $region37: #{tpu_custom_call.1} parent=35 // pred_check
          %p299 = pneg %p56
        $region38: #{tpu_custom_call.1} parent=35 // pred_check_branch
          %301 = sbr.rel (%p299) target = $region40
        $region39: #{tpu_custom_call.1} parent=35 // pred_region
          %s302 = sand.u32 %s46, 1
          %s303 = scalar_lea.sflag [#allocation4], %s302
          %s304 = sand.u32 %s46, 1
          %s305 = smul.addr %s304, 16
          %s306 = scalar_lea.vmem [#allocation3], %s305
          %s307 = smul.u32 2, %s29
          %s308 = smul.u32 2, %s30
          %s310 = ssub.s32 256, 256
          %311 = vsyncadd %s303, %s310
          %s312 = smul.addr %s307, 8
          %s313 = sadd.s32 %s308, %s312
          %s314 = smul.addr %s313, 64
          %s315 = scalar_lea.hbm %s0, %s314
          %s316 = sshll.u32 %s306, 4
          %s317 = int_to_ptr.vmem [resolvable:$true] %s316
          %322 = dma.hbm_to_vmem [thread:$0]  %s315, 256, %s317, %s303, 512, 128, 8
        $region40: #{tpu_custom_call.1} parent=35 // pred_fallthru
          _
        // Predicated region
        $region41: #{tpu_custom_call.1} parent=35 // pred_check
          %p323 = pneg %p82
        $region42: #{tpu_custom_call.1} parent=35 // pred_check_branch
          %325 = sbr.rel (%p323) target = $region44
        $region43: #{tpu_custom_call.1} parent=35 // pred_region
          %s326 = sand.u32 %s22, 1
          %s327 = scalar_lea.sflag [#allocation7], %s326
          %s328 = sand.u32 %s72, 1
          %s329 = smul.addr %s328, 640
          %s330 = scalar_lea.vmem [#allocation6], %s329
          %s331 = smul.u32 32, %s30
          %s333 = ssub.s32 10240, 10240
          %334 = vsyncadd %s327, %s333
          %s335 = smul.addr %s331, 5
          %s336 = smul.addr %s335, 64
          %s337 = scalar_lea.hbm %s1, %s336
          %s338 = sshll.u32 %s330, 4
          %s339 = int_to_ptr.vmem [resolvable:$true] %s338
          %344 = dma.hbm_to_vmem [thread:$0]  %s337, 10240, %s339, %s327, 320, 320, 20
        $region44: #{tpu_custom_call.1} parent=35 // pred_fallthru
          _
      $region36: #{tpu_custom_call.1} parent=5 // pred_fallthru
        _
      %p345 = scmp.le.s32.totalorder 1, %s22
      %p346 = scmp.lt.s32.totalorder %s22, 5
      %p347 = pnand %p345, %p346
      %p348 = pneg %p347
      // Predicated region
      $region45: #{tpu_custom_call.1} parent=5 // pred_check
        _
      $region46: #{tpu_custom_call.1} parent=5 // pred_check_branch
        %350 = sbr.rel (%p347) target = $region48
      $region47: #{tpu_custom_call.1} parent=5 // pred_region
        %s351 = ssub.s32 %s22, 1
        %s352 = sand.u32 %s49, 1
        %s353 = scalar_lea.sflag [#allocation4], %s352
        %s354 = sand.u32 %s49, 1
        %s355 = smul.addr %s354, 16
        %s356 = scalar_lea.vmem [#allocation3], %s355
        // Predicated region
        $region49: #{tpu_custom_call.1} parent=47 // pred_check
          %p357 = pneg %p62
        $region50: #{tpu_custom_call.1} parent=47 // pred_check_branch
          %359 = sbr.rel (%p357) target = $region52
        $region51: #{tpu_custom_call.1} parent=47 // pred_region
          %360 = dma.done %s353, 256
        $region52: #{tpu_custom_call.1} parent=47 // pred_fallthru
          _
        %s361 = sand.u32 %s27, 1
        %s362 = scalar_lea.sflag [#allocation7], %s361
        %s363 = sand.u32 %s75, 1
        %s364 = smul.addr %s363, 640
        %s365 = scalar_lea.vmem [#allocation6], %s364
        // Predicated region
        $region53: #{tpu_custom_call.1} parent=47 // pred_check
          %p366 = pneg %p88
        $region54: #{tpu_custom_call.1} parent=47 // pred_check_branch
          %368 = sbr.rel (%p366) target = $region56
        $region55: #{tpu_custom_call.1} parent=47 // pred_region
          %369 = dma.done %s362, 10240
        $region56: #{tpu_custom_call.1} parent=47 // pred_fallthru
          _
        // Predicated region
        $region57: #{tpu_custom_call.1} parent=47 // pred_check
          %p370 = pneg %p109
        $region58: #{tpu_custom_call.1} parent=47 // pred_check_branch
          %372 = sbr.rel (%p370) target = $region60
        $region59: #{tpu_custom_call.1} parent=47 // pred_region
          %373 = dma.done [#allocation7], 2048
        $region60: #{tpu_custom_call.1} parent=47 // pred_fallthru
          _
        // Predicated region
        $region61: #{tpu_custom_call.1} parent=47 // pred_check
          %p374 = pneg %p130
        $region62: #{tpu_custom_call.1} parent=47 // pred_check_branch
          %376 = sbr.rel (%p374) target = $region64
        $region63: #{tpu_custom_call.1} parent=47 // pred_region
          %377 = dma.done [#allocation10], 16
        $region64: #{tpu_custom_call.1} parent=47 // pred_fallthru
          _
        // Predicated region
        $region65: #{tpu_custom_call.1} parent=47 // pred_check
          %p378 = pneg %p151
        $region66: #{tpu_custom_call.1} parent=47 // pred_check_branch
          %380 = sbr.rel (%p378) target = $region68
        $region67: #{tpu_custom_call.1} parent=47 // pred_region
          %381 = dma.done [#allocation10], 2048
        $region68: #{tpu_custom_call.1} parent=47 // pred_fallthru
          _
        // Predicated region
        $region69: #{tpu_custom_call.1} parent=47 // pred_check
          %p382 = pneg %p172
        $region70: #{tpu_custom_call.1} parent=47 // pred_check_branch
          %384 = sbr.rel (%p382) target = $region72
        $region71: #{tpu_custom_call.1} parent=47 // pred_region
          %385 = dma.done [#allocation13], 16
        $region72: #{tpu_custom_call.1} parent=47 // pred_fallthru
          _
        // Predicated region
        $region73: #{tpu_custom_call.1} parent=47 // pred_check
          %p386 = pneg %p193
        $region74: #{tpu_custom_call.1} parent=47 // pred_check_branch
          %388 = sbr.rel (%p386) target = $region76
        $region75: #{tpu_custom_call.1} parent=47 // pred_region
          %389 = dma.done [#allocation13], 8192
        $region76: #{tpu_custom_call.1} parent=47 // pred_fallthru
          _
        %s390 = sand.u32 %s49, 1
        %s391 = scalar_lea.sflag [#allocation4], %s390
        %s392 = sand.u32 %s49, 1
        %s393 = smul.addr %s392, 16
        %s394 = scalar_lea.vmem [#allocation3], %s393
        %p395 = pneg %p62
        %p396 = pneg %p59
        %s397 = sand.u32 %s27, 1
        %s398 = scalar_lea.sflag [#allocation7], %s397
        %s399 = sand.u32 %s75, 1
        %s400 = smul.addr %s399, 640
        %s401 = scalar_lea.vmem [#allocation6], %s400
        %p402 = pneg %p88
        %p403 = pneg %p85
        %p404 = pneg %p109
        %p405 = pneg %p106
        %p406 = pneg %p130
        %p407 = pneg %p127
        %p408 = pneg %p151
        %p409 = pneg %p148
        %p410 = pneg %p172
        %p411 = pneg %p169
        %p412 = pneg %p193
        %p413 = pneg %p190
        %p414 = pneg %p219
        %p415 = pneg %p216
        %s416 = smul.u32 2, %s31
        %s417 = smul.u32 2, %s32
        %s418 = smul.u32 32, %s32
        %s419 = smul.u32 2, %s31
        %p421 = scmp.eq.s32.totalorder %s32, 0
        // Predicated region
        $region77: #{tpu_custom_call.1} parent=47 // pred_check
          %p422 = pneg %p421
        $region78: #{tpu_custom_call.1} parent=47 // pred_check_branch
          %424 = sbr.rel (%p422) target = $region80
        $region79: #{tpu_custom_call.1} parent=47 // pred_region
          %425 = vst [vmem:[#allocation2] sm:$0xff] 0.0
          %426 = vst [vmem:[#allocation2 + $0x8] sm:$0xff] 0.0
          %427 = vst [vmem:[#allocation2 + $0x10] sm:$0xff] 0.0
          %428 = vst [vmem:[#allocation2 + $0x18] sm:$0xff] 0.0
          %429 = vst [vmem:[#allocation2 + $0x20] sm:$0xff] 0.0
          %430 = vst [vmem:[#allocation2 + $0x28] sm:$0xff] 0.0
          %431 = vst [vmem:[#allocation2 + $0x30] sm:$0xff] 0.0
          %432 = vst [vmem:[#allocation2 + $0x38] sm:$0xff] 0.0
          %433 = vst [vmem:[#allocation2 + $0x40] sm:$0xff] 0.0
          %434 = vst [vmem:[#allocation2 + $0x48] sm:$0xff] 0.0
        $region80: #{tpu_custom_call.1} parent=47 // pred_fallthru
          _
        %v435 = vld [vmem:[#allocation2] sm:$0xff]
        %v436 = vld [vmem:[#allocation2 + $0x8] sm:$0xff]
        %v437 = vld [vmem:[#allocation2 + $0x10] sm:$0xff]
        %v438 = vld [vmem:[#allocation2 + $0x18] sm:$0xff]
        %v439 = vld [vmem:[#allocation2 + $0x20] sm:$0xff]
        %v440 = vld [vmem:[#allocation2 + $0x28] sm:$0xff]
        %v441 = vld [vmem:[#allocation2 + $0x30] sm:$0xff]
        %v442 = vld [vmem:[#allocation2 + $0x38] sm:$0xff]
        %v443 = vld [vmem:[#allocation2 + $0x40] sm:$0xff]
        %v444 = vld [vmem:[#allocation2 + $0x48] sm:$0xff]
        %v445 = vld [vmem:[%s356] sm:$0xff]
        %v446 = vld [vmem:[%s356 + $0x8] sm:$0xff]
        %v447 = vld [vmem:[%s365] sm:$0xff]
        %v448 = vld [vmem:[%s365 + $0x8] sm:$0xff]
        %v449 = vld [vmem:[%s365 + $0x10] sm:$0xf]
        %v450 = vld [vmem:[%s365 + $0x14] sm:$0xff]
        %v451 = vld [vmem:[%s365 + $0x1c] sm:$0xff]
        %v452 = vld [vmem:[%s365 + $0x24] sm:$0xf]
        %v453 = vld [vmem:[%s365 + $0x28] sm:$0xff]
        %v454 = vld [vmem:[%s365 + $0x30] sm:$0xff]
        %v455 = vld [vmem:[%s365 + $0x38] sm:$0xf]
        %v456 = vld [vmem:[%s365 + $0x3c] sm:$0xff]
        %v457 = vld [vmem:[%s365 + $0x44] sm:$0xff]
        %v458 = vld [vmem:[%s365 + $0x4c] sm:$0xf]
        %v459 = vld [vmem:[%s365 + $0x50] sm:$0xff]
        %v460 = vld [vmem:[%s365 + $0x58] sm:$0xff]
        %v461 = vld [vmem:[%s365 + $0x60] sm:$0xf]
        %v462 = vld [vmem:[%s365 + $0x64] sm:$0xff]
        %v463 = vld [vmem:[%s365 + $0x6c] sm:$0xff]
        %v464 = vld [vmem:[%s365 + $0x74] sm:$0xf]
        %v465 = vld [vmem:[%s365 + $0x78] sm:$0xff]
        %v466 = vld [vmem:[%s365 + $0x80] sm:$0xff]
        %v467 = vld [vmem:[%s365 + $0x88] sm:$0xf]
        %v468 = vld [vmem:[%s365 + $0x8c] sm:$0xff]
        %v469 = vld [vmem:[%s365 + $0x94] sm:$0xff]
        %v470 = vld [vmem:[%s365 + $0x9c] sm:$0xf]
        %v471 = vld [vmem:[%s365 + $0xa0] sm:$0xff]
        %v472 = vld [vmem:[%s365 + $0xa8] sm:$0xff]
        %v473 = vld [vmem:[%s365 + $0xb0] sm:$0xf]
        %v474 = vld [vmem:[%s365 + $0xb4] sm:$0xff]
        %v475 = vld [vmem:[%s365 + $0xbc] sm:$0xff]
        %v476 = vld [vmem:[%s365 + $0xc4] sm:$0xf]
        %v477 = vld [vmem:[%s365 + $0xc8] sm:$0xff]
        %v478 = vld [vmem:[%s365 + $0xd0] sm:$0xff]
        %v479 = vld [vmem:[%s365 + $0xd8] sm:$0xf]
        %v480 = vld [vmem:[%s365 + $0xdc] sm:$0xff]
        %v481 = vld [vmem:[%s365 + $0xe4] sm:$0xff]
        %v482 = vld [vmem:[%s365 + $0xec] sm:$0xf]
        %v483 = vld [vmem:[%s365 + $0xf0] sm:$0xff]
        %v484 = vld [vmem:[%s365 + $0xf8] sm:$0xff]
        %v485 = vld [vmem:[%s365 + $0x100] sm:$0xf]
        %v486 = vld [vmem:[%s365 + $0x104] sm:$0xff]
        %v487 = vld [vmem:[%s365 + $0x10c] sm:$0xff]
        %v488 = vld [vmem:[%s365 + $0x114] sm:$0xf]
        %v489 = vld [vmem:[%s365 + $0x118] sm:$0xff]
        %v490 = vld [vmem:[%s365 + $0x120] sm:$0xff]
        %v491 = vld [vmem:[%s365 + $0x128] sm:$0xf]
        %v492 = vld [vmem:[%s365 + $0x12c] sm:$0xff]
        %v493 = vld [vmem:[%s365 + $0x134] sm:$0xff]
        %v494 = vld [vmem:[%s365 + $0x13c] sm:$0xf]
        %v495 = vld [vmem:[%s365 + $0x140] sm:$0xff]
        %v496 = vld [vmem:[%s365 + $0x148] sm:$0xff]
        %v497 = vld [vmem:[%s365 + $0x150] sm:$0xf]
        %v498 = vld [vmem:[%s365 + $0x154] sm:$0xff]
        %v499 = vld [vmem:[%s365 + $0x15c] sm:$0xff]
        %v500 = vld [vmem:[%s365 + $0x164] sm:$0xf]
        %v501 = vld [vmem:[%s365 + $0x168] sm:$0xff]
        %v502 = vld [vmem:[%s365 + $0x170] sm:$0xff]
        %v503 = vld [vmem:[%s365 + $0x178] sm:$0xf]
        %v504 = vld [vmem:[%s365 + $0x17c] sm:$0xff]
        %v505 = vld [vmem:[%s365 + $0x184] sm:$0xff]
        %v506 = vld [vmem:[%s365 + $0x18c] sm:$0xf]
        %v507 = vld [vmem:[%s365 + $0x190] sm:$0xff]
        %v508 = vld [vmem:[%s365 + $0x198] sm:$0xff]
        %v509 = vld [vmem:[%s365 + $0x1a0] sm:$0xf]
        %v510 = vld [vmem:[%s365 + $0x1a4] sm:$0xff]
        %v511 = vld [vmem:[%s365 + $0x1ac] sm:$0xff]
        %v512 = vld [vmem:[%s365 + $0x1b4] sm:$0xf]
        %v513 = vld [vmem:[%s365 + $0x1b8] sm:$0xff]
        %v514 = vld [vmem:[%s365 + $0x1c0] sm:$0xff]
        %v515 = vld [vmem:[%s365 + $0x1c8] sm:$0xf]
        %v516 = vld [vmem:[%s365 + $0x1cc] sm:$0xff]
        %v517 = vld [vmem:[%s365 + $0x1d4] sm:$0xff]
        %v518 = vld [vmem:[%s365 + $0x1dc] sm:$0xf]
        %v519 = vld [vmem:[%s365 + $0x1e0] sm:$0xff]
        %v520 = vld [vmem:[%s365 + $0x1e8] sm:$0xff]
        %v521 = vld [vmem:[%s365 + $0x1f0] sm:$0xf]
        %v522 = vld [vmem:[%s365 + $0x1f4] sm:$0xff]
        %v523 = vld [vmem:[%s365 + $0x1fc] sm:$0xff]
        %v524 = vld [vmem:[%s365 + $0x204] sm:$0xf]
        %v525 = vld [vmem:[%s365 + $0x208] sm:$0xff]
        %v526 = vld [vmem:[%s365 + $0x210] sm:$0xff]
        %v527 = vld [vmem:[%s365 + $0x218] sm:$0xf]
        %v528 = vld [vmem:[%s365 + $0x21c] sm:$0xff]
        %v529 = vld [vmem:[%s365 + $0x224] sm:$0xff]
        %v530 = vld [vmem:[%s365 + $0x22c] sm:$0xf]
        %v531 = vld [vmem:[%s365 + $0x230] sm:$0xff]
        %v532 = vld [vmem:[%s365 + $0x238] sm:$0xff]
        %v533 = vld [vmem:[%s365 + $0x240] sm:$0xf]
        %v534 = vld [vmem:[%s365 + $0x244] sm:$0xff]
        %v535 = vld [vmem:[%s365 + $0x24c] sm:$0xff]
        %v536 = vld [vmem:[%s365 + $0x254] sm:$0xf]
        %v537 = vld [vmem:[%s365 + $0x258] sm:$0xff]
        %v538 = vld [vmem:[%s365 + $0x260] sm:$0xff]
        %v539 = vld [vmem:[%s365 + $0x268] sm:$0xf]
        %v540 = vld [vmem:[%s365 + $0x26c] sm:$0xff]
        %v541 = vld [vmem:[%s365 + $0x274] sm:$0xff]
        %v542 = vld [vmem:[%s365 + $0x27c] sm:$0xf]
        %v545 = vunpack.c.l.b16 %v445
        %v546 = vunpack.c.h.b16 %v445
        %v547 = vunpack.c.l.b16 %v446
        %v548 = vunpack.c.h.b16 %v446
        %v549 = vpack.c.b16 %v547, %v545
        %v550 = vpack.c.b16 %v548, %v546
        %v649 = vunpack.c.l.b16 %v447
        %v650 = vunpack.c.h.b16 %v447
        %v651 = vunpack.c.l.b16 %v448
        %v652 = vunpack.c.h.b16 %v448
        %v653 = vunpack.c.l.b16 %v449
        %v654 = vunpack.c.l.b16 %v450
        %v655 = vunpack.c.h.b16 %v450
        %v656 = vunpack.c.l.b16 %v451
        %v657 = vunpack.c.h.b16 %v451
        %v658 = vunpack.c.l.b16 %v452
        %v659 = vunpack.c.l.b16 %v453
        %v660 = vunpack.c.h.b16 %v453
        %v661 = vunpack.c.l.b16 %v454
        %v662 = vunpack.c.h.b16 %v454
        %v663 = vunpack.c.l.b16 %v455
        %v664 = vunpack.c.l.b16 %v456
        %v665 = vunpack.c.h.b16 %v456
        %v666 = vunpack.c.l.b16 %v457
        %v667 = vunpack.c.h.b16 %v457
        %v668 = vunpack.c.l.b16 %v458
        %v669 = vunpack.c.l.b16 %v459
        %v670 = vunpack.c.h.b16 %v459
        %v671 = vunpack.c.l.b16 %v460
        %v672 = vunpack.c.h.b16 %v460
        %v673 = vunpack.c.l.b16 %v461
        %v674 = vunpack.c.l.b16 %v462
        %v675 = vunpack.c.h.b16 %v462
        %v676 = vunpack.c.l.b16 %v463
        %v677 = vunpack.c.h.b16 %v463
        %v678 = vunpack.c.l.b16 %v464
        %v679 = vunpack.c.l.b16 %v465
        %v680 = vunpack.c.h.b16 %v465
        %v681 = vunpack.c.l.b16 %v466
        %v682 = vunpack.c.h.b16 %v466
        %v683 = vunpack.c.l.b16 %v467
        %v684 = vunpack.c.l.b16 %v468
        %v685 = vunpack.c.h.b16 %v468
        %v686 = vunpack.c.l.b16 %v469
        %v687 = vunpack.c.h.b16 %v469
        %v688 = vunpack.c.l.b16 %v470
        %v689 = vunpack.c.l.b16 %v471
        %v690 = vunpack.c.h.b16 %v471
        %v691 = vunpack.c.l.b16 %v472
        %v692 = vunpack.c.h.b16 %v472
        %v693 = vunpack.c.l.b16 %v473
        %v694 = vunpack.c.l.b16 %v474
        %v695 = vunpack.c.h.b16 %v474
        %v696 = vunpack.c.l.b16 %v475
        %v697 = vunpack.c.h.b16 %v475
        %v698 = vunpack.c.l.b16 %v476
        %v699 = vunpack.c.l.b16 %v477
        %v700 = vunpack.c.h.b16 %v477
        %v701 = vunpack.c.l.b16 %v478
        %v702 = vunpack.c.h.b16 %v478
        %v703 = vunpack.c.l.b16 %v479
        %v704 = vunpack.c.l.b16 %v480
        %v705 = vunpack.c.h.b16 %v480
        %v706 = vunpack.c.l.b16 %v481
        %v707 = vunpack.c.h.b16 %v481
        %v708 = vunpack.c.l.b16 %v482
        %v709 = vunpack.c.l.b16 %v483
        %v710 = vunpack.c.h.b16 %v483
        %v711 = vunpack.c.l.b16 %v484
        %v712 = vunpack.c.h.b16 %v484
        %v713 = vunpack.c.l.b16 %v485
        %v714 = vunpack.c.l.b16 %v486
        %v715 = vunpack.c.h.b16 %v486
        %v716 = vunpack.c.l.b16 %v487
        %v717 = vunpack.c.h.b16 %v487
        %v718 = vunpack.c.l.b16 %v488
        %v719 = vunpack.c.l.b16 %v489
        %v720 = vunpack.c.h.b16 %v489
        %v721 = vunpack.c.l.b16 %v490
        %v722 = vunpack.c.h.b16 %v490
        %v723 = vunpack.c.l.b16 %v491
        %v724 = vunpack.c.l.b16 %v492
        %v725 = vunpack.c.h.b16 %v492
        %v726 = vunpack.c.l.b16 %v493
        %v727 = vunpack.c.h.b16 %v493
        %v728 = vunpack.c.l.b16 %v494
        %v729 = vunpack.c.l.b16 %v495
        %v730 = vunpack.c.h.b16 %v495
        %v731 = vunpack.c.l.b16 %v496
        %v732 = vunpack.c.h.b16 %v496
        %v733 = vunpack.c.l.b16 %v497
        %v734 = vunpack.c.l.b16 %v498
        %v735 = vunpack.c.h.b16 %v498
        %v736 = vunpack.c.l.b16 %v499
        %v737 = vunpack.c.h.b16 %v499
        %v738 = vunpack.c.l.b16 %v500
        %v739 = vunpack.c.l.b16 %v501
        %v740 = vunpack.c.h.b16 %v501
        %v741 = vunpack.c.l.b16 %v502
        %v742 = vunpack.c.h.b16 %v502
        %v743 = vunpack.c.l.b16 %v503
        %v744 = vunpack.c.l.b16 %v504
        %v745 = vunpack.c.h.b16 %v504
        %v746 = vunpack.c.l.b16 %v505
        %v747 = vunpack.c.h.b16 %v505
        %v748 = vunpack.c.l.b16 %v506
        %v749 = vunpack.c.l.b16 %v507
        %v750 = vunpack.c.h.b16 %v507
        %v751 = vunpack.c.l.b16 %v508
        %v752 = vunpack.c.h.b16 %v508
        %v753 = vunpack.c.l.b16 %v509
        %v754 = vunpack.c.l.b16 %v510
        %v755 = vunpack.c.h.b16 %v510
        %v756 = vunpack.c.l.b16 %v511
        %v757 = vunpack.c.h.b16 %v511
        %v758 = vunpack.c.l.b16 %v512
        %v759 = vunpack.c.l.b16 %v513
        %v760 = vunpack.c.h.b16 %v513
        %v761 = vunpack.c.l.b16 %v514
        %v762 = vunpack.c.h.b16 %v514
        %v763 = vunpack.c.l.b16 %v515
        %v764 = vunpack.c.l.b16 %v516
        %v765 = vunpack.c.h.b16 %v516
        %v766 = vunpack.c.l.b16 %v517
        %v767 = vunpack.c.h.b16 %v517
        %v768 = vunpack.c.l.b16 %v518
        %v769 = vunpack.c.l.b16 %v519
        %v770 = vunpack.c.h.b16 %v519
        %v771 = vunpack.c.l.b16 %v520
        %v772 = vunpack.c.h.b16 %v520
        %v773 = vunpack.c.l.b16 %v521
        %v774 = vunpack.c.l.b16 %v522
        %v775 = vunpack.c.h.b16 %v522
        %v776 = vunpack.c.l.b16 %v523
        %v777 = vunpack.c.h.b16 %v523
        %v778 = vunpack.c.l.b16 %v524
        %v779 = vunpack.c.l.b16 %v525
        %v780 = vunpack.c.h.b16 %v525
        %v781 = vunpack.c.l.b16 %v526
        %v782 = vunpack.c.h.b16 %v526
        %v783 = vunpack.c.l.b16 %v527
        %v784 = vunpack.c.l.b16 %v528
        %v785 = vunpack.c.h.b16 %v528
        %v786 = vunpack.c.l.b16 %v529
        %v787 = vunpack.c.h.b16 %v529
        %v788 = vunpack.c.l.b16 %v530
        %v789 = vunpack.c.l.b16 %v531
        %v790 = vunpack.c.h.b16 %v531
        %v791 = vunpack.c.l.b16 %v532
        %v792 = vunpack.c.h.b16 %v532
        %v793 = vunpack.c.l.b16 %v533
        %v794 = vunpack.c.l.b16 %v534
        %v795 = vunpack.c.h.b16 %v534
        %v796 = vunpack.c.l.b16 %v535
        %v797 = vunpack.c.h.b16 %v535
        %v798 = vunpack.c.l.b16 %v536
        %v799 = vunpack.c.l.b16 %v537
        %v800 = vunpack.c.h.b16 %v537
        %v801 = vunpack.c.l.b16 %v538
        %v802 = vunpack.c.h.b16 %v538
        %v803 = vunpack.c.l.b16 %v539
        %v804 = vunpack.c.l.b16 %v540
        %v805 = vunpack.c.h.b16 %v540
        %v806 = vunpack.c.l.b16 %v541
        %v807 = vunpack.c.h.b16 %v541
        %v808 = vunpack.c.l.b16 %v542
        %v809 = vpack.c.b16 %v654, %v649
        %v810 = vpack.c.b16 %v655, %v650
        %v811 = vpack.c.b16 %v656, %v651
        %v812 = vpack.c.b16 %v657, %v652
        %v813 = vpack.c.b16 %v658, %v653
        %v814 = vpack.c.b16 %v664, %v659
        %v815 = vpack.c.b16 %v665, %v660
        %v816 = vpack.c.b16 %v666, %v661
        %v817 = vpack.c.b16 %v667, %v662
        %v818 = vpack.c.b16 %v668, %v663
        %v819 = vpack.c.b16 %v674, %v669
        %v820 = vpack.c.b16 %v675, %v670
        %v821 = vpack.c.b16 %v676, %v671
        %v822 = vpack.c.b16 %v677, %v672
        %v823 = vpack.c.b16 %v678, %v673
        %v824 = vpack.c.b16 %v684, %v679
        %v825 = vpack.c.b16 %v685, %v680
        %v826 = vpack.c.b16 %v686, %v681
        %v827 = vpack.c.b16 %v687, %v682
        %v828 = vpack.c.b16 %v688, %v683
        %v829 = vpack.c.b16 %v694, %v689
        %v830 = vpack.c.b16 %v695, %v690
        %v831 = vpack.c.b16 %v696, %v691
        %v832 = vpack.c.b16 %v697, %v692
        %v833 = vpack.c.b16 %v698, %v693
        %v834 = vpack.c.b16 %v704, %v699
        %v835 = vpack.c.b16 %v705, %v700
        %v836 = vpack.c.b16 %v706, %v701
        %v837 = vpack.c.b16 %v707, %v702
        %v838 = vpack.c.b16 %v708, %v703
        %v839 = vpack.c.b16 %v714, %v709
        %v840 = vpack.c.b16 %v715, %v710
        %v841 = vpack.c.b16 %v716, %v711
        %v842 = vpack.c.b16 %v717, %v712
        %v843 = vpack.c.b16 %v718, %v713
        %v844 = vpack.c.b16 %v724, %v719
        %v845 = vpack.c.b16 %v725, %v720
        %v846 = vpack.c.b16 %v726, %v721
        %v847 = vpack.c.b16 %v727, %v722
        %v848 = vpack.c.b16 %v728, %v723
        %v849 = vpack.c.b16 %v734, %v729
        %v850 = vpack.c.b16 %v735, %v730
        %v851 = vpack.c.b16 %v736, %v731
        %v852 = vpack.c.b16 %v737, %v732
        %v853 = vpack.c.b16 %v738, %v733
        %v854 = vpack.c.b16 %v744, %v739
        %v855 = vpack.c.b16 %v745, %v740
        %v856 = vpack.c.b16 %v746, %v741
        %v857 = vpack.c.b16 %v747, %v742
        %v858 = vpack.c.b16 %v748, %v743
        %v859 = vpack.c.b16 %v754, %v749
        %v860 = vpack.c.b16 %v755, %v750
        %v861 = vpack.c.b16 %v756, %v751
        %v862 = vpack.c.b16 %v757, %v752
        %v863 = vpack.c.b16 %v758, %v753
        %v864 = vpack.c.b16 %v764, %v759
        %v865 = vpack.c.b16 %v765, %v760
        %v866 = vpack.c.b16 %v766, %v761
        %v867 = vpack.c.b16 %v767, %v762
        %v868 = vpack.c.b16 %v768, %v763
        %v869 = vpack.c.b16 %v774, %v769
        %v870 = vpack.c.b16 %v775, %v770
        %v871 = vpack.c.b16 %v776, %v771
        %v872 = vpack.c.b16 %v777, %v772
        %v873 = vpack.c.b16 %v778, %v773
        %v874 = vpack.c.b16 %v784, %v779
        %v875 = vpack.c.b16 %v785, %v780
        %v876 = vpack.c.b16 %v786, %v781
        %v877 = vpack.c.b16 %v787, %v782
        %v878 = vpack.c.b16 %v788, %v783
        %v879 = vpack.c.b16 %v794, %v789
        %v880 = vpack.c.b16 %v795, %v790
        %v881 = vpack.c.b16 %v796, %v791
        %v882 = vpack.c.b16 %v797, %v792
        %v883 = vpack.c.b16 %v798, %v793
        %v884 = vpack.c.b16 %v804, %v799
        %v885 = vpack.c.b16 %v805, %v800
        %v886 = vpack.c.b16 %v806, %v801
        %v887 = vpack.c.b16 %v807, %v802
        %v888 = vpack.c.b16 %v808, %v803
        %969 = vmatprep.subr.bf16.mxu0 %v810
        %970 = vmatpush1.bf16.msra.mxu0 %v809
        %971 = vmatprep.subr.bf16.mxu0 %v815
        %972 = vmatpush1.bf16.msra.mxu0 %v814
        %973 = vmatprep.subr.bf16.mxu0 %v820
        %974 = vmatpush1.bf16.msra.mxu0 %v819
        %975 = vmatprep.subr.bf16.mxu0 %v825
        %976 = vmatpush1.bf16.msra.mxu0 %v824
        %977 = vmatprep.subr.bf16.mxu0 %v830
        %978 = vmatpush1.bf16.msra.mxu0 %v829
        %979 = vmatprep.subr.bf16.mxu0 %v835
        %980 = vmatpush1.bf16.msra.mxu0 %v834
        %981 = vmatprep.subr.bf16.mxu0 %v840
        %982 = vmatpush1.bf16.msra.mxu0 %v839
        %983 = vmatprep.subr.bf16.mxu0 %v845
        %984 = vmatpush1.bf16.msra.mxu0 %v844
        %985 = vmatprep.subr.bf16.mxu0 %v850
        %986 = vmatpush1.bf16.msra.mxu0 %v849
        %987 = vmatprep.subr.bf16.mxu0 %v855
        %988 = vmatpush1.bf16.msra.mxu0 %v854
        %989 = vmatprep.subr.bf16.mxu0 %v860
        %990 = vmatpush1.bf16.msra.mxu0 %v859
        %991 = vmatprep.subr.bf16.mxu0 %v865
        %992 = vmatpush1.bf16.msra.mxu0 %v864
        %993 = vmatprep.subr.bf16.mxu0 %v870
        %994 = vmatpush1.bf16.msra.mxu0 %v869
        %995 = vmatprep.subr.bf16.mxu0 %v875
        %996 = vmatpush1.bf16.msra.mxu0 %v874
        %997 = vmatprep.subr.bf16.mxu0 %v880
        %998 = vmatpush1.bf16.msra.mxu0 %v879
        %999 = vmatprep.subr.bf16.mxu0 %v885
        %1000 = vmatpush1.bf16.msra.mxu0 %v884
        %1001 = vmatprep.mubr.bf16.mxu0 %v550
        %1002 = vmatmul.mubr.bf16.gmra.mrb[0].mxu0 %v549
        %v1003 = vpop.f32.mrb[0].mxu0
        %v1004 = vadd.f32 0.0, %v1003
        %v1005 = vpop.f32.mrb[0].mxu0
        %v1006 = vadd.f32 0.0, %v1005
        %v1007 = vpop.f32.mrb[0].mxu0
        %v1008 = vadd.f32 0.0, %v1007
        %v1009 = vpop.f32.mrb[0].mxu0
        %v1010 = vadd.f32 0.0, %v1009
        %1011 = vdwg.mxu0
        %1012 = vmatprep.subr.bf16.mxu0 %v812
        %1013 = vmatpush1.bf16.msra.mxu0 %v811
        %1014 = vmatprep.subr.bf16.mxu0 %v817
        %1015 = vmatpush1.bf16.msra.mxu0 %v816
        %1016 = vmatprep.subr.bf16.mxu0 %v822
        %1017 = vmatpush1.bf16.msra.mxu0 %v821
        %1018 = vmatprep.subr.bf16.mxu0 %v827
        %1019 = vmatpush1.bf16.msra.mxu0 %v826
        %1020 = vmatprep.subr.bf16.mxu0 %v832
        %1021 = vmatpush1.bf16.msra.mxu0 %v831
        %1022 = vmatprep.subr.bf16.mxu0 %v837
        %1023 = vmatpush1.bf16.msra.mxu0 %v836
        %1024 = vmatprep.subr.bf16.mxu0 %v842
        %1025 = vmatpush1.bf16.msra.mxu0 %v841
        %1026 = vmatprep.subr.bf16.mxu0 %v847
        %1027 = vmatpush1.bf16.msra.mxu0 %v846
        %1028 = vmatprep.subr.bf16.mxu0 %v852
        %1029 = vmatpush1.bf16.msra.mxu0 %v851
        %1030 = vmatprep.subr.bf16.mxu0 %v857
        %1031 = vmatpush1.bf16.msra.mxu0 %v856
        %1032 = vmatprep.subr.bf16.mxu0 %v862
        %1033 = vmatpush1.bf16.msra.mxu0 %v861
        %1034 = vmatprep.subr.bf16.mxu0 %v867
        %1035 = vmatpush1.bf16.msra.mxu0 %v866
        %1036 = vmatprep.subr.bf16.mxu0 %v872
        %1037 = vmatpush1.bf16.msra.mxu0 %v871
        %1038 = vmatprep.subr.bf16.mxu0 %v877
        %1039 = vmatpush1.bf16.msra.mxu0 %v876
        %1040 = vmatprep.subr.bf16.mxu0 %v882
        %1041 = vmatpush1.bf16.msra.mxu0 %v881
        %1042 = vmatprep.subr.bf16.mxu0 %v887
        %1043 = vmatpush1.bf16.msra.mxu0 %v886
        %1044 = vmatprep.mubr.bf16.mxu0 %v550
        %1045 = vmatmul.mubr.bf16.gmra.mrb[0].mxu0 %v549
        %v1046 = vpop.f32.mrb[0].mxu0
        %v1047 = vadd.f32 0.0, %v1046
        %v1048 = vpop.f32.mrb[0].mxu0
        %v1049 = vadd.f32 0.0, %v1048
        %v1050 = vpop.f32.mrb[0].mxu0
        %v1051 = vadd.f32 0.0, %v1050
        %v1052 = vpop.f32.mrb[0].mxu0
        %v1053 = vadd.f32 0.0, %v1052
        %1054 = vdwg.mxu0
        %1055 = vmatprep.subr.bf16.mxu0 0
        %1056 = vmatpush1.bf16.msra.mxu0 %v813
        %1057 = vmatprep.subr.bf16.mxu0 0
        %1058 = vmatpush1.bf16.msra.mxu0 %v818
        %1059 = vmatprep.subr.bf16.mxu0 0
        %1060 = vmatpush1.bf16.msra.mxu0 %v823
        %1061 = vmatprep.subr.bf16.mxu0 0
        %1062 = vmatpush1.bf16.msra.mxu0 %v828
        %1063 = vmatprep.subr.bf16.mxu0 0
        %1064 = vmatpush1.bf16.msra.mxu0 %v833
        %1065 = vmatprep.subr.bf16.mxu0 0
        %1066 = vmatpush1.bf16.msra.mxu0 %v838
        %1067 = vmatprep.subr.bf16.mxu0 0
        %1068 = vmatpush1.bf16.msra.mxu0 %v843
        %1069 = vmatprep.subr.bf16.mxu0 0
        %1070 = vmatpush1.bf16.msra.mxu0 %v848
        %1071 = vmatprep.subr.bf16.mxu0 0
        %1072 = vmatpush1.bf16.msra.mxu0 %v853
        %1073 = vmatprep.subr.bf16.mxu0 0
        %1074 = vmatpush1.bf16.msra.mxu0 %v858
        %1075 = vmatprep.subr.bf16.mxu0 0
        %1076 = vmatpush1.bf16.msra.mxu0 %v863
        %1077 = vmatprep.subr.bf16.mxu0 0
        %1078 = vmatpush1.bf16.msra.mxu0 %v868
        %1079 = vmatprep.subr.bf16.mxu0 0
        %1080 = vmatpush1.bf16.msra.mxu0 %v873
        %1081 = vmatprep.subr.bf16.mxu0 0
        %1082 = vmatpush1.bf16.msra.mxu0 %v878
        %1083 = vmatprep.subr.bf16.mxu0 0
        %1084 = vmatpush1.bf16.msra.mxu0 %v883
        %1085 = vmatprep.subr.bf16.mxu0 0
        %1086 = vmatpush1.bf16.msra.mxu0 %v888
        %1087 = vmatprep.mubr.bf16.mxu0 %v550
        %1088 = vmatmul.mubr.bf16.gmra.mrb[0].mxu0 %v549
        %v1089 = vpop.f32.mrb[0].mxu0
        %v1090 = vadd.f32 0.0, %v1089
        %v1091 = vpop.f32.mrb[0].mxu0
        %v1092 = vpop.f32.mrb[0].mxu0
        %v1093 = vadd.f32 0.0, %v1092
        %v1094 = vpop.f32.mrb[0].mxu0
        %1095 = vdwg.mxu0
        %v1096 = vadd.f32 %v435, %v1004
        %v1097 = vadd.f32 %v436, %v1006
        %v1098 = vadd.f32 %v437, %v1047
        %v1099 = vadd.f32 %v438, %v1049
        %v1100 = vadd.f32 %v439, %v1090
        %v1101 = vadd.f32 %v440, %v1008
        %v1102 = vadd.f32 %v441, %v1010
        %v1103 = vadd.f32 %v442, %v1051
        %v1104 = vadd.f32 %v443, %v1053
        %v1105 = vadd.f32 %v444, %v1093
        %1106 = vst [vmem:[#allocation2] sm:$0xff] %v1096
        %1107 = vst [vmem:[#allocation2 + $0x8] sm:$0xff] %v1097
        %1108 = vst [vmem:[#allocation2 + $0x10] sm:$0xff] %v1098
        %1109 = vst [vmem:[#allocation2 + $0x18] sm:$0xff] %v1099
        %1110 = vst [vmem:[#allocation2 + $0x20] sm:$0xff] %v1100
        %1111 = vst [vmem:[#allocation2 + $0x28] sm:$0xff] %v1101
        %1112 = vst [vmem:[#allocation2 + $0x30] sm:$0xff] %v1102
        %1113 = vst [vmem:[#allocation2 + $0x38] sm:$0xff] %v1103
        %1114 = vst [vmem:[#allocation2 + $0x40] sm:$0xff] %v1104
        %1115 = vst [vmem:[#allocation2 + $0x48] sm:$0xff] %v1105
        %p1116 = scmp.eq.s32.totalorder %s32, 3
        // Predicated region
        $region81: #{tpu_custom_call.1} parent=47 // pred_check
          %p1117 = pneg %p1116
        $region82: #{tpu_custom_call.1} parent=47 // pred_check_branch
          %1119 = sbr.rel (%p1117) target = $region84
        $region83: #{tpu_custom_call.1} parent=47 // pred_region
          %v1120 = vld [vmem:[#allocation2] sm:$0xff]
          %v1121 = vld [vmem:[#allocation2 + $0x8] sm:$0xff]
          %v1122 = vld [vmem:[#allocation2 + $0x10] sm:$0xff]
          %v1123 = vld [vmem:[#allocation2 + $0x18] sm:$0xff]
          %v1124 = vld [vmem:[#allocation2 + $0x20] sm:$0xff]
          %v1125 = vld [vmem:[#allocation2 + $0x28] sm:$0xff]
          %v1126 = vld [vmem:[#allocation2 + $0x30] sm:$0xff]
          %v1127 = vld [vmem:[#allocation2 + $0x38] sm:$0xff]
          %v1128 = vld [vmem:[#allocation2 + $0x40] sm:$0xff]
          %v1129 = vld [vmem:[#allocation2 + $0x48] sm:$0xff]
          %v1130 = vld [vmem:[#allocation8] sm:$0xff]
          %v1131 = vld [vmem:[#allocation8 + $0x8] sm:$0xff]
          %v1132 = vld [vmem:[#allocation8 + $0x10] sm:$0xff]
          %v1133 = vld [vmem:[#allocation8 + $0x18] sm:$0xff]
          %v1134 = vld [vmem:[#allocation8 + $0x20] sm:$0xff]
          %v1135 = vld [vmem:[#allocation8 + $0x28] sm:$0xff]
          %v1136 = vld [vmem:[#allocation8 + $0x30] sm:$0xff]
          %v1137 = vld [vmem:[#allocation8 + $0x38] sm:$0xff]
          %v1138 = vld [vmem:[#allocation8 + $0x40] sm:$0xff]
          %v1139 = vld [vmem:[#allocation8 + $0x48] sm:$0xff]
          %v1140 = vld [vmem:[#allocation8 + $0x50] sm:$0xff]
          %v1141 = vld [vmem:[#allocation8 + $0x58] sm:$0xff]
          %v1142 = vld [vmem:[#allocation8 + $0x60] sm:$0xff]
          %v1143 = vld [vmem:[#allocation8 + $0x68] sm:$0xff]
          %v1144 = vld [vmem:[#allocation8 + $0x70] sm:$0xff]
          %v1145 = vld [vmem:[#allocation8 + $0x78] sm:$0xff]
          %v1146 = vld [vmem:[#allocation9] sm:$0x1]
          %v1148 = vlaneseq
          %v1149 = vshrl.u32 %v1148, 7
          %v1150 = vsub.s32 0, %v1149
          %v1151 = vrot.slane %v1146, %v1150
          %1153 = vmatprep.subr.mxu0 0.0
          %1154 = vmatpush1.msra.mxu0 %v1130
          %1155 = vmatprep.subr.mxu0 0.0
          %1156 = vmatpush1.msra.mxu0 %v1131
          %1157 = vmatprep.subr.mxu0 0.0
          %1158 = vmatpush1.msra.mxu0 %v1132
          %1159 = vmatprep.subr.mxu0 0.0
          %1160 = vmatpush1.msra.mxu0 %v1133
          %1161 = vmatprep.subr.mxu0 0.0
          %1162 = vmatpush1.msra.mxu0 %v1134
          %1163 = vmatprep.subr.mxu0 0.0
          %1164 = vmatpush1.msra.mxu0 %v1135
          %1165 = vmatprep.subr.mxu0 0.0
          %1166 = vmatpush1.msra.mxu0 %v1136
          %1167 = vmatprep.subr.mxu0 0.0
          %1168 = vmatpush1.msra.mxu0 %v1137
          %1169 = vmatprep.subr.mxu0 0.0
          %1170 = vmatpush1.msra.mxu0 %v1138
          %1171 = vmatprep.subr.mxu0 0.0
          %1172 = vmatpush1.msra.mxu0 %v1139
          %1173 = vmatprep.subr.mxu0 0.0
          %1174 = vmatpush1.msra.mxu0 %v1140
          %1175 = vmatprep.subr.mxu0 0.0
          %1176 = vmatpush1.msra.mxu0 %v1141
          %1177 = vmatprep.subr.mxu0 0.0
          %1178 = vmatpush1.msra.mxu0 %v1142
          %1179 = vmatprep.subr.mxu0 0.0
          %1180 = vmatpush1.msra.mxu0 %v1143
          %1181 = vmatprep.subr.mxu0 0.0
          %1182 = vmatpush1.msra.mxu0 %v1144
          %1183 = vmatprep.subr.mxu0 0.0
          %1184 = vmatpush1.msra.mxu0 %v1145
          %1185 = vmatprep.subr.mxu0 0.0
          %1186 = vmatpush1.msra.mxu0 0.0
          %1187 = vmatprep.subr.mxu0 0.0
          %1188 = vmatpush1.msra.mxu0 0.0
          %1189 = vmatprep.subr.mxu0 0.0
          %1190 = vmatpush1.msra.mxu0 0.0
          %1191 = vmatprep.subr.mxu0 0.0
          %1192 = vmatpush1.msra.mxu0 0.0
          %1193 = vmatprep.subr.mxu0 0.0
          %1194 = vmatpush1.msra.mxu0 0.0
          %1195 = vmatprep.subr.mxu0 0.0
          %1196 = vmatpush1.msra.mxu0 0.0
          %1197 = vmatprep.subr.mxu0 0.0
          %1198 = vmatpush1.msra.mxu0 0.0
          %1199 = vmatprep.subr.mxu0 0.0
          %1200 = vmatpush1.msra.mxu0 0.0
          %1201 = vmatprep.subr.mxu0 0.0
          %1202 = vmatpush1.msra.mxu0 0.0
          %1203 = vmatprep.subr.mxu0 0.0
          %1204 = vmatpush1.msra.mxu0 0.0
          %1205 = vmatprep.subr.mxu0 0.0
          %1206 = vmatpush1.msra.mxu0 0.0
          %1207 = vmatprep.subr.mxu0 0.0
          %1208 = vmatpush1.msra.mxu0 0.0
          %1209 = vmatprep.subr.mxu0 0.0
          %1210 = vmatpush1.msra.mxu0 0.0
          %1211 = vmatprep.subr.mxu0 0.0
          %1212 = vmatpush1.msra.mxu0 0.0
          %1213 = vmatprep.subr.mxu0 0.0
          %1214 = vmatpush1.msra.mxu0 0.0
          %1215 = vmatprep.subr.mxu0 0.0
          %1216 = vmatpush1.msra.mxu0 0.0
          %1217 = vmatprep.mubr.f32.mxu0 0.0
          %1218 = vmatmul.mubr.f32.gmra.mrb[0].mxu0 %v1120
          %v1219 = vpop.f32.mrb[0].mxu0
          %v1220 = vadd.f32 %v1151, %v1219
          %v1221 = vpop.f32.mrb[0].mxu0
          %1222 = vmatprep.mubr.f32.mxu0 0.0
          %1223 = vmatmul.mubr.f32.gmra.mrb[0].mxu0 %v1125
          %v1224 = vpop.f32.mrb[0].mxu0
          %v1225 = vadd.f32 %v1151, %v1224
          %v1226 = vpop.f32.mrb[0].mxu0
          %1227 = vdwg.mxu0
          %v1228 = vmax.f32 %v1220, 0.0
          %v1229 = vmax.f32 %v1225, 0.0
          %v1230 = vld [vmem:[#allocation11] sm:$0xff]
          %v1231 = vld [vmem:[#allocation11 + $0x8] sm:$0xff]
          %v1232 = vld [vmem:[#allocation11 + $0x10] sm:$0xff]
          %v1233 = vld [vmem:[#allocation11 + $0x18] sm:$0xff]
          %v1234 = vld [vmem:[#allocation11 + $0x20] sm:$0xff]
          %v1235 = vld [vmem:[#allocation11 + $0x28] sm:$0xff]
          %v1236 = vld [vmem:[#allocation11 + $0x30] sm:$0xff]
          %v1237 = vld [vmem:[#allocation11 + $0x38] sm:$0xff]
          %v1238 = vld [vmem:[#allocation11 + $0x40] sm:$0xff]
          %v1239 = vld [vmem:[#allocation11 + $0x48] sm:$0xff]
          %v1240 = vld [vmem:[#allocation11 + $0x50] sm:$0xff]
          %v1241 = vld [vmem:[#allocation11 + $0x58] sm:$0xff]
          %v1242 = vld [vmem:[#allocation11 + $0x60] sm:$0xff]
          %v1243 = vld [vmem:[#allocation11 + $0x68] sm:$0xff]
          %v1244 = vld [vmem:[#allocation11 + $0x70] sm:$0xff]
          %v1245 = vld [vmem:[#allocation11 + $0x78] sm:$0xff]
          %v1246 = vld [vmem:[#allocation12] sm:$0x1]
          %v1248 = vlaneseq
          %v1249 = vshrl.u32 %v1248, 7
          %v1250 = vsub.s32 0, %v1249
          %v1251 = vrot.slane %v1246, %v1250
          %1253 = vmatprep.subr.mxu0 0.0
          %1254 = vmatpush1.msra.mxu0 %v1230
          %1255 = vmatprep.subr.mxu0 0.0
          %1256 = vmatpush1.msra.mxu0 %v1231
          %1257 = vmatprep.subr.mxu0 0.0
          %1258 = vmatpush1.msra.mxu0 %v1232
          %1259 = vmatprep.subr.mxu0 0.0
          %1260 = vmatpush1.msra.mxu0 %v1233
          %1261 = vmatprep.subr.mxu0 0.0
          %1262 = vmatpush1.msra.mxu0 %v1234
          %1263 = vmatprep.subr.mxu0 0.0
          %1264 = vmatpush1.msra.mxu0 %v1235
          %1265 = vmatprep.subr.mxu0 0.0
          %1266 = vmatpush1.msra.mxu0 %v1236
          %1267 = vmatprep.subr.mxu0 0.0
          %1268 = vmatpush1.msra.mxu0 %v1237
          %1269 = vmatprep.subr.mxu0 0.0
          %1270 = vmatpush1.msra.mxu0 %v1238
          %1271 = vmatprep.subr.mxu0 0.0
          %1272 = vmatpush1.msra.mxu0 %v1239
          %1273 = vmatprep.subr.mxu0 0.0
          %1274 = vmatpush1.msra.mxu0 %v1240
          %1275 = vmatprep.subr.mxu0 0.0
          %1276 = vmatpush1.msra.mxu0 %v1241
          %1277 = vmatprep.subr.mxu0 0.0
          %1278 = vmatpush1.msra.mxu0 %v1242
          %1279 = vmatprep.subr.mxu0 0.0
          %1280 = vmatpush1.msra.mxu0 %v1243
          %1281 = vmatprep.subr.mxu0 0.0
          %1282 = vmatpush1.msra.mxu0 %v1244
          %1283 = vmatprep.subr.mxu0 0.0
          %1284 = vmatpush1.msra.mxu0 %v1245
          %1285 = vmatprep.subr.mxu0 0.0
          %1286 = vmatpush1.msra.mxu0 0.0
          %1287 = vmatprep.subr.mxu0 0.0
          %1288 = vmatpush1.msra.mxu0 0.0
          %1289 = vmatprep.subr.mxu0 0.0
          %1290 = vmatpush1.msra.mxu0 0.0
          %1291 = vmatprep.subr.mxu0 0.0
          %1292 = vmatpush1.msra.mxu0 0.0
          %1293 = vmatprep.subr.mxu0 0.0
          %1294 = vmatpush1.msra.mxu0 0.0
          %1295 = vmatprep.subr.mxu0 0.0
          %1296 = vmatpush1.msra.mxu0 0.0
          %1297 = vmatprep.subr.mxu0 0.0
          %1298 = vmatpush1.msra.mxu0 0.0
          %1299 = vmatprep.subr.mxu0 0.0
          %1300 = vmatpush1.msra.mxu0 0.0
          %1301 = vmatprep.subr.mxu0 0.0
          %1302 = vmatpush1.msra.mxu0 0.0
          %1303 = vmatprep.subr.mxu0 0.0
          %1304 = vmatpush1.msra.mxu0 0.0
          %1305 = vmatprep.subr.mxu0 0.0
          %1306 = vmatpush1.msra.mxu0 0.0
          %1307 = vmatprep.subr.mxu0 0.0
          %1308 = vmatpush1.msra.mxu0 0.0
          %1309 = vmatprep.subr.mxu0 0.0
          %1310 = vmatpush1.msra.mxu0 0.0
          %1311 = vmatprep.subr.mxu0 0.0
          %1312 = vmatpush1.msra.mxu0 0.0
          %1313 = vmatprep.subr.mxu0 0.0
          %1314 = vmatpush1.msra.mxu0 0.0
          %1315 = vmatprep.subr.mxu0 0.0
          %1316 = vmatpush1.msra.mxu0 0.0
          %1317 = vmatprep.mubr.f32.mxu0 0.0
          %1318 = vmatmul.mubr.f32.gmra.mrb[0].mxu0 %v1228
          %v1319 = vpop.f32.mrb[0].mxu0
          %v1320 = vadd.f32 %v1251, %v1319
          %v1321 = vpop.f32.mrb[0].mxu0
          %1322 = vmatprep.mubr.f32.mxu0 0.0
          %1323 = vmatmul.mubr.f32.gmra.mrb[0].mxu0 %v1229
          %v1324 = vpop.f32.mrb[0].mxu0
          %v1325 = vadd.f32 %v1251, %v1324
          %v1326 = vpop.f32.mrb[0].mxu0
          %1327 = vdwg.mxu0
          %v1328 = vld [vmem:[#allocation14] sm:$0xff]
          %v1329 = vld [vmem:[#allocation14 + $0x8] sm:$0xff]
          %v1330 = vld [vmem:[#allocation14 + $0x10] sm:$0xff]
          %v1331 = vld [vmem:[#allocation14 + $0x18] sm:$0xff]
          %v1332 = vld [vmem:[#allocation14 + $0x20] sm:$0xff]
          %v1333 = vld [vmem:[#allocation14 + $0x28] sm:$0xff]
          %v1334 = vld [vmem:[#allocation14 + $0x30] sm:$0xff]
          %v1335 = vld [vmem:[#allocation14 + $0x38] sm:$0xff]
          %v1336 = vld [vmem:[#allocation14 + $0x40] sm:$0xff]
          %v1337 = vld [vmem:[#allocation14 + $0x48] sm:$0xff]
          %v1338 = vld [vmem:[#allocation14 + $0x50] sm:$0xff]
          %v1339 = vld [vmem:[#allocation14 + $0x58] sm:$0xff]
          %v1340 = vld [vmem:[#allocation14 + $0x60] sm:$0xff]
          %v1341 = vld [vmem:[#allocation14 + $0x68] sm:$0xff]
          %v1342 = vld [vmem:[#allocation14 + $0x70] sm:$0xff]
          %v1343 = vld [vmem:[#allocation14 + $0x78] sm:$0xff]
          %v1344 = vld [vmem:[#allocation14 + $0x80] sm:$0xff]
          %v1345 = vld [vmem:[#allocation14 + $0x88] sm:$0xff]
          %v1346 = vld [vmem:[#allocation14 + $0x90] sm:$0xff]
          %v1347 = vld [vmem:[#allocation14 + $0x98] sm:$0xff]
          %v1348 = vld [vmem:[#allocation14 + $0xa0] sm:$0xff]
          %v1349 = vld [vmem:[#allocation14 + $0xa8] sm:$0xff]
          %v1350 = vld [vmem:[#allocation14 + $0xb0] sm:$0xff]
          %v1351 = vld [vmem:[#allocation14 + $0xb8] sm:$0xff]
          %v1352 = vld [vmem:[#allocation14 + $0xc0] sm:$0xff]
          %v1353 = vld [vmem:[#allocation14 + $0xc8] sm:$0xff]
          %v1354 = vld [vmem:[#allocation14 + $0xd0] sm:$0xff]
          %v1355 = vld [vmem:[#allocation14 + $0xd8] sm:$0xff]
          %v1356 = vld [vmem:[#allocation14 + $0xe0] sm:$0xff]
          %v1357 = vld [vmem:[#allocation14 + $0xe8] sm:$0xff]
          %v1358 = vld [vmem:[#allocation14 + $0xf0] sm:$0xff]
          %v1359 = vld [vmem:[#allocation14 + $0xf8] sm:$0xff]
          %v1360 = vld [vmem:[#allocation14 + $0x100] sm:$0xff]
          %v1361 = vld [vmem:[#allocation14 + $0x108] sm:$0xff]
          %v1362 = vld [vmem:[#allocation14 + $0x110] sm:$0xff]
          %v1363 = vld [vmem:[#allocation14 + $0x118] sm:$0xff]
          %v1364 = vld [vmem:[#allocation14 + $0x120] sm:$0xff]
          %v1365 = vld [vmem:[#allocation14 + $0x128] sm:$0xff]
          %v1366 = vld [vmem:[#allocation14 + $0x130] sm:$0xff]
          %v1367 = vld [vmem:[#allocation14 + $0x138] sm:$0xff]
          %v1368 = vld [vmem:[#allocation14 + $0x140] sm:$0xff]
          %v1369 = vld [vmem:[#allocation14 + $0x148] sm:$0xff]
          %v1370 = vld [vmem:[#allocation14 + $0x150] sm:$0xff]
          %v1371 = vld [vmem:[#allocation14 + $0x158] sm:$0xff]
          %v1372 = vld [vmem:[#allocation14 + $0x160] sm:$0xff]
          %v1373 = vld [vmem:[#allocation14 + $0x168] sm:$0xff]
          %v1374 = vld [vmem:[#allocation14 + $0x170] sm:$0xff]
          %v1375 = vld [vmem:[#allocation14 + $0x178] sm:$0xff]
          %v1376 = vld [vmem:[#allocation14 + $0x180] sm:$0xff]
          %v1377 = vld [vmem:[#allocation14 + $0x188] sm:$0xff]
          %v1378 = vld [vmem:[#allocation14 + $0x190] sm:$0xff]
          %v1379 = vld [vmem:[#allocation14 + $0x198] sm:$0xff]
          %v1380 = vld [vmem:[#allocation14 + $0x1a0] sm:$0xff]
          %v1381 = vld [vmem:[#allocation14 + $0x1a8] sm:$0xff]
          %v1382 = vld [vmem:[#allocation14 + $0x1b0] sm:$0xff]
          %v1383 = vld [vmem:[#allocation14 + $0x1b8] sm:$0xff]
          %v1384 = vld [vmem:[#allocation14 + $0x1c0] sm:$0xff]
          %v1385 = vld [vmem:[#allocation14 + $0x1c8] sm:$0xff]
          %v1386 = vld [vmem:[#allocation14 + $0x1d0] sm:$0xff]
          %v1387 = vld [vmem:[#allocation14 + $0x1d8] sm:$0xff]
          %v1388 = vld [vmem:[#allocation14 + $0x1e0] sm:$0xff]
          %v1389 = vld [vmem:[#allocation14 + $0x1e8] sm:$0xff]
          %v1390 = vld [vmem:[#allocation14 + $0x1f0] sm:$0xff]
          %v1391 = vld [vmem:[#allocation14 + $0x1f8] sm:$0xff]
          %1392 = vmatprep.subr.mxu0 %v1329
          %1393 = vmatpush1.msra.mxu0 %v1328
          %1394 = vmatprep.subr.mxu0 %v1333
          %1395 = vmatpush1.msra.mxu0 %v1332
          %1396 = vmatprep.subr.mxu0 %v1337
          %1397 = vmatpush1.msra.mxu0 %v1336
          %1398 = vmatprep.subr.mxu0 %v1341
          %1399 = vmatpush1.msra.mxu0 %v1340
          %1400 = vmatprep.subr.mxu0 %v1345
          %1401 = vmatpush1.msra.mxu0 %v1344
          %1402 = vmatprep.subr.mxu0 %v1349
          %1403 = vmatpush1.msra.mxu0 %v1348
          %1404 = vmatprep.subr.mxu0 %v1353
          %1405 = vmatpush1.msra.mxu0 %v1352
          %1406 = vmatprep.subr.mxu0 %v1357
          %1407 = vmatpush1.msra.mxu0 %v1356
          %1408 = vmatprep.subr.mxu0 %v1361
          %1409 = vmatpush1.msra.mxu0 %v1360
          %1410 = vmatprep.subr.mxu0 %v1365
          %1411 = vmatpush1.msra.mxu0 %v1364
          %1412 = vmatprep.subr.mxu0 %v1369
          %1413 = vmatpush1.msra.mxu0 %v1368
          %1414 = vmatprep.subr.mxu0 %v1373
          %1415 = vmatpush1.msra.mxu0 %v1372
          %1416 = vmatprep.subr.mxu0 %v1377
          %1417 = vmatpush1.msra.mxu0 %v1376
          %1418 = vmatprep.subr.mxu0 %v1381
          %1419 = vmatpush1.msra.mxu0 %v1380
          %1420 = vmatprep.subr.mxu0 %v1385
          %1421 = vmatpush1.msra.mxu0 %v1384
          %1422 = vmatprep.subr.mxu0 %v1389
          %1423 = vmatpush1.msra.mxu0 %v1388
          %1424 = vmatprep.subr.mxu0 0.0
          %1425 = vmatpush1.msra.mxu0 0.0
          %1426 = vmatprep.subr.mxu0 0.0
          %1427 = vmatpush1.msra.mxu0 0.0
          %1428 = vmatprep.subr.mxu0 0.0
          %1429 = vmatpush1.msra.mxu0 0.0
          %1430 = vmatprep.subr.mxu0 0.0
          %1431 = vmatpush1.msra.mxu0 0.0
          %1432 = vmatprep.subr.mxu0 0.0
          %1433 = vmatpush1.msra.mxu0 0.0
          %1434 = vmatprep.subr.mxu0 0.0
          %1435 = vmatpush1.msra.mxu0 0.0
          %1436 = vmatprep.subr.mxu0 0.0
          %1437 = vmatpush1.msra.mxu0 0.0
          %1438 = vmatprep.subr.mxu0 0.0
          %1439 = vmatpush1.msra.mxu0 0.0
          %1440 = vmatprep.subr.mxu0 0.0
          %1441 = vmatpush1.msra.mxu0 0.0
          %1442 = vmatprep.subr.mxu0 0.0
          %1443 = vmatpush1.msra.mxu0 0.0
          %1444 = vmatprep.subr.mxu0 0.0
          %1445 = vmatpush1.msra.mxu0 0.0
          %1446 = vmatprep.subr.mxu0 0.0
          %1447 = vmatpush1.msra.mxu0 0.0
          %1448 = vmatprep.subr.mxu0 0.0
          %1449 = vmatpush1.msra.mxu0 0.0
          %1450 = vmatprep.subr.mxu0 0.0
          %1451 = vmatpush1.msra.mxu0 0.0
          %1452 = vmatprep.subr.mxu0 0.0
          %1453 = vmatpush1.msra.mxu0 0.0
          %1454 = vmatprep.subr.mxu0 0.0
          %1455 = vmatpush1.msra.mxu0 0.0
          %1456 = vmatprep.mubr.f32.mxu0 0.0
          %1457 = vmatmul.mubr.f32.gmra.mrb[0].mxu0 %v1320
          %v1458 = vpop.f32.mrb[0].mxu0
          %v1459 = vadd.f32 0.0, %v1458
          %v1460 = vpop.f32.mrb[0].mxu0
          %v1461 = vadd.f32 0.0, %v1460
          %1462 = vmatprep.mubr.f32.mxu0 0.0
          %1463 = vmatmul.mubr.f32.gmra.mrb[0].mxu0 %v1325
          %v1464 = vpop.f32.mrb[0].mxu0
          %v1465 = vadd.f32 0.0, %v1464
          %v1466 = vpop.f32.mrb[0].mxu0
          %v1467 = vadd.f32 0.0, %v1466
          %1468 = vdwg.mxu0
          %1469 = vmatprep.subr.mxu0 %v1331
          %1470 = vmatpush1.msra.mxu0 %v1330
          %1471 = vmatprep.subr.mxu0 %v1335
          %1472 = vmatpush1.msra.mxu0 %v1334
          %1473 = vmatprep.subr.mxu0 %v1339
          %1474 = vmatpush1.msra.mxu0 %v1338
          %1475 = vmatprep.subr.mxu0 %v1343
          %1476 = vmatpush1.msra.mxu0 %v1342
          %1477 = vmatprep.subr.mxu0 %v1347
          %1478 = vmatpush1.msra.mxu0 %v1346
          %1479 = vmatprep.subr.mxu0 %v1351
          %1480 = vmatpush1.msra.mxu0 %v1350
          %1481 = vmatprep.subr.mxu0 %v1355
          %1482 = vmatpush1.msra.mxu0 %v1354
          %1483 = vmatprep.subr.mxu0 %v1359
          %1484 = vmatpush1.msra.mxu0 %v1358
          %1485 = vmatprep.subr.mxu0 %v1363
          %1486 = vmatpush1.msra.mxu0 %v1362
          %1487 = vmatprep.subr.mxu0 %v1367
          %1488 = vmatpush1.msra.mxu0 %v1366
          %1489 = vmatprep.subr.mxu0 %v1371
          %1490 = vmatpush1.msra.mxu0 %v1370
          %1491 = vmatprep.subr.mxu0 %v1375
          %1492 = vmatpush1.msra.mxu0 %v1374
          %1493 = vmatprep.subr.mxu0 %v1379
          %1494 = vmatpush1.msra.mxu0 %v1378
          %1495 = vmatprep.subr.mxu0 %v1383
          %1496 = vmatpush1.msra.mxu0 %v1382
          %1497 = vmatprep.subr.mxu0 %v1387
          %1498 = vmatpush1.msra.mxu0 %v1386
          %1499 = vmatprep.subr.mxu0 %v1391
          %1500 = vmatpush1.msra.mxu0 %v1390
          %1501 = vmatprep.subr.mxu0 0.0
          %1502 = vmatpush1.msra.mxu0 0.0
          %1503 = vmatprep.subr.mxu0 0.0
          %1504 = vmatpush1.msra.mxu0 0.0
          %1505 = vmatprep.subr.mxu0 0.0
          %1506 = vmatpush1.msra.mxu0 0.0
          %1507 = vmatprep.subr.mxu0 0.0
          %1508 = vmatpush1.msra.mxu0 0.0
          %1509 = vmatprep.subr.mxu0 0.0
          %1510 = vmatpush1.msra.mxu0 0.0
          %1511 = vmatprep.subr.mxu0 0.0
          %1512 = vmatpush1.msra.mxu0 0.0
          %1513 = vmatprep.subr.mxu0 0.0
          %1514 = vmatpush1.msra.mxu0 0.0
          %1515 = vmatprep.subr.mxu0 0.0
          %1516 = vmatpush1.msra.mxu0 0.0
          %1517 = vmatprep.subr.mxu0 0.0
          %1518 = vmatpush1.msra.mxu0 0.0
          %1519 = vmatprep.subr.mxu0 0.0
          %1520 = vmatpush1.msra.mxu0 0.0
          %1521 = vmatprep.subr.mxu0 0.0
          %1522 = vmatpush1.msra.mxu0 0.0
          %1523 = vmatprep.subr.mxu0 0.0
          %1524 = vmatpush1.msra.mxu0 0.0
          %1525 = vmatprep.subr.mxu0 0.0
          %1526 = vmatpush1.msra.mxu0 0.0
          %1527 = vmatprep.subr.mxu0 0.0
          %1528 = vmatpush1.msra.mxu0 0.0
          %1529 = vmatprep.subr.mxu0 0.0
          %1530 = vmatpush1.msra.mxu0 0.0
          %1531 = vmatprep.subr.mxu0 0.0
          %1532 = vmatpush1.msra.mxu0 0.0
          %1533 = vmatprep.mubr.f32.mxu0 0.0
          %1534 = vmatmul.mubr.f32.gmra.mrb[0].mxu0 %v1320
          %v1535 = vpop.f32.mrb[0].mxu0
          %v1536 = vadd.f32 0.0, %v1535
          %v1537 = vpop.f32.mrb[0].mxu0
          %v1538 = vadd.f32 0.0, %v1537
          %1539 = vmatprep.mubr.f32.mxu0 0.0
          %1540 = vmatmul.mubr.f32.gmra.mrb[0].mxu0 %v1325
          %v1541 = vpop.f32.mrb[0].mxu0
          %v1542 = vadd.f32 0.0, %v1541
          %v1543 = vpop.f32.mrb[0].mxu0
          %v1544 = vadd.f32 0.0, %v1543
          %1545 = vdwg.mxu0
          %v1546 = vmul.f32 %v1459, %v1121
          %v1547 = vmul.f32 %v1461, %v1122
          %v1548 = vmul.f32 %v1536, %v1123
          %v1549 = vmul.f32 %v1538, %v1124
          %v1550 = vmul.f32 %v1465, %v1126
          %v1551 = vmul.f32 %v1467, %v1127
          %v1552 = vmul.f32 %v1542, %v1128
          %v1553 = vmul.f32 %v1544, %v1129
          %v1554 = vadd.f32 %v1120, %v1546
          %v1555 = vadd.f32 %v1125, %v1550
          %v1556 = vadd.f32 %v1554, %v1547
          %v1557 = vadd.f32 %v1555, %v1551
          %v1558 = vadd.f32 %v1556, %v1548
          %v1559 = vadd.f32 %v1557, %v1552
          %v1560 = vadd.f32 %v1558, %v1549
          %v1561 = vadd.f32 %v1559, %v1553
          %1562 = vst [vmem:[#allocation15] sm:$0xff] %v1560
          %1563 = vst [vmem:[#allocation15 + $0x8] sm:$0xff] %v1561
        $region84: #{tpu_custom_call.1} parent=47 // pred_fallthru
          _
        // Predicated region
        $region85: #{tpu_custom_call.1} parent=47 // pred_check
          %p1564 = pneg %p216
        $region86: #{tpu_custom_call.1} parent=47 // pred_check_branch
          %1566 = sbr.rel (%p1564) target = $region88
        $region87: #{tpu_custom_call.1} parent=47 // pred_region
          %s1567 = smul.u32 2, %s31
          %s1569 = ssub.s32 256, 256
          %1570 = vsyncadd [#allocation5], %s1569
          %s1571 = smul.addr %s1567, 128
          %s1572 = scalar_lea.hbm %s7, %s1571
          %s1573 = sshll.u32 [#allocation15], 4
          %s1574 = int_to_ptr.vmem [resolvable:$true] %s1573
          %1579 = dma.vmem_to_hbm [thread:$0]  %s1574, 256, %s1572, [#allocation5], 128, 128, 8
        $region88: #{tpu_custom_call.1} parent=47 // pred_fallthru
          _
        // Predicated region
        $region89: #{tpu_custom_call.1} parent=47 // pred_check
          %p1580 = pneg %p216
        $region90: #{tpu_custom_call.1} parent=47 // pred_check_branch
          %1582 = sbr.rel (%p1580) target = $region92
        $region91: #{tpu_custom_call.1} parent=47 // pred_region
          %1583 = dma.done [#allocation5], 256
        $region92: #{tpu_custom_call.1} parent=47 // pred_fallthru
          _
      $region48: #{tpu_custom_call.1} parent=5 // pred_fallthru
        _
      %p1584 = scmp.le.s32.totalorder 2, %s22
      // Predicated region
      $region93: #{tpu_custom_call.1} parent=5 // pred_check
        %p1585 = pneg %p1584
      $region94: #{tpu_custom_call.1} parent=5 // pred_check_branch
        %1587 = sbr.rel (%p1585) target = $region96
      $region95: #{tpu_custom_call.1} parent=5 // pred_region
        %s1588 = ssub.s32 %s22, 2
      $region96: #{tpu_custom_call.1} parent=5 // pred_fallthru
        _
    $region6: #{tpu_custom_call.1} parent=1 // loop_footer
      %s26 = sadd.s32 1, %s22
    $region7: #{tpu_custom_call.1} parent=1 // loop_footer_branch
      %21 = sbr.rel target = $region3
    $region8: #{tpu_custom_call.1} parent=1 // loop_exit
      _
    %1589 = vsyncpa [#allocation4], 1
    %s1590 = scalar_lea.sflag [#allocation4], 1
    %1591 = vsyncpa %s1590, 1
    %1592 = vsyncpa [#allocation7], 1
    %s1593 = scalar_lea.sflag [#allocation7], 1
    %1594 = vsyncpa %s1593, 1
    %1595 = vsyncpa [#allocation10], 1
    %1596 = vsyncpa [#allocation13], 1
    %1597 = vsyncpa [#allocation5], 1
    %s1598 = scalar_lea.sflag [#allocation5], 1
    %1599 = vsyncpa %s1598, 1

</llo_original>
